<compile_context>
chip_gen: v7x
topology: tpu7x:2x2x1
jax: 0.10.0
libtpu: 0.0.40
codegen_flags: <defaults>
</compile_context>

<pallas_src>
import jax
import jax.numpy as jnp
from jax.experimental import pallas as pl
from jax.experimental.pallas import tpu as pltpu

LN_EPS = 1e-5

# MXU operand dtype.  bf16 ~doubles MXU throughput on every generation and
# halves weight/activation DMA bytes; accumulation stays f32 via
# preferred_element_type, and all elementwise / LayerNorm / state math stays
# f32 (important on v5e which has no bf16 VPU/EUP).
MXU_DTYPE = jnp.bfloat16


def _layernorm(x, gamma, beta):
    mu = jnp.mean(x, axis=-1, keepdims=True)
    var = jnp.mean((x - mu) ** 2, axis=-1, keepdims=True)
    return (x - mu) * jax.lax.rsqrt(var + LN_EPS) * gamma + beta


def _vmem_limit_bytes():
    # Derive the scoped-VMEM limit from the actual chip (v5e/v6e: 128 MiB,
    # v7x: 64 MiB) instead of hard-coding, leaving headroom for Mosaic.
    try:
        cap = pltpu.get_tpu_info().vmem_capacity_bytes
    except Exception:
        cap = 64 * 1024 * 1024
    return int(min(cap * 3 // 4, 96 * 1024 * 1024))


def _pick_tt(T, B, H, vmem_budget):
    """Timesteps per kernel-2 grid step.

    Must be a multiple of 8 when it does not cover the full (padded) time
    axis (block-shape sublane rule); sized against the VMEM budget and capped
    so the statically unrolled recurrence stays small.
    """
    if T <= 8:
        return T
    # Rough per-timestep f32 bytes resident in kernel 2:
    #   fc in (x2 buffers) + y out (x2) + gates_x scratch (4H) + h scratch.
    per_t = 4 * B * H * (2 + 2 + 4 + 1)
    fixed = 2 * (H * 4 * H) * 2 * 2          # bf16 W_ih^T / W_hh^T blocks, double-buffered
    avail = max(vmem_budget // 2 - fixed, per_t * 8)
    tt = min(32, max(8, (avail // per_t) // 8 * 8))
    return int(tt)


# ---------------------------------------------------------------------------
# Kernel 1: Linear -> PReLU -> Linear -> PReLU -> LayerNorm
# ---------------------------------------------------------------------------
def fc_block_kernel(x_ref, w1t_ref, b1_ref, a1_ref, w2t_ref, b2_ref, a2_ref,
                    ln0w_ref, ln0b_ref, fc_ref):
    x = x_ref[...].astype(MXU_DTYPE)                                   # (TM, Din)
    h1 = jnp.dot(x, w1t_ref[...], preferred_element_type=jnp.float32) + b1_ref[...]
    a1 = a1_ref[0]                                                     # SMEM scalar
    h1 = jnp.where(h1 >= 0.0, h1, a1 * h1)                             # PReLU (f32)
    h2 = jnp.dot(h1.astype(MXU_DTYPE), w2t_ref[...],
                 preferred_element_type=jnp.float32) + b2_ref[...]
    a2 = a2_ref[0]
    h2 = jnp.where(h2 >= 0.0, h2, a2 * h2)                             # PReLU (f32)
    fc_ref[...] = _layernorm(h2, ln0w_ref[...], ln0b_ref[...]).astype(fc_ref.dtype)


# ---------------------------------------------------------------------------
# Kernel 2: LSTM recurrence (gate order i,f,g,o) + LN1 -> residual -> LN2
# ---------------------------------------------------------------------------
def lstm_block_kernel(fc_ref,                      # (TT*B, H) f32, time-major rows
                      wiht_ref, bias_ref,          # (H,4H) bf16, (1,4H) f32
                      whht_ref,                    # (H,4H) bf16
                      ln1w_ref, ln1b_ref, ln2w_ref, ln2b_ref,
                      y_ref,                       # (B, TT, H) f32 output block
                      h_scr, c_scr,                # (B, H) f32, persistent state
                      hblk_scr):                   # (TT, B, H) f32 per-step h
    Bq, TT, H = y_ref.shape

    # Fresh state at the first time block (scratch persists across grid steps;
    # the single grid axis is time and runs sequentially / 'arbitrary').
    @pl.when(pl.program_id(0) == 0)
    def _():
        h_scr[...] = jnp.zeros_like(h_scr)
        c_scr[...] = jnp.zeros_like(c_scr)

    fc2 = fc_ref[...]                              # (TT*B, H) f32
    wiht = wiht_ref[...]                           # bf16
    whht = whht_ref[...]                           # bf16

    # LSTM input projection for the whole time block as one large matmul with
    # the (b_ih + b_hh) bias folded in.  Kept in VMEM: no (N, 4H) HBM traffic.
    gx = jnp.dot(fc2.astype(MXU_DTYPE), wiht,
                 preferred_element_type=jnp.float32) + bias_ref[...]   # (TT*B, 4H)

    # Serial recurrence, statically unrolled.  Only h @ W_hh^T + gate math is
    # on the critical path; LayerNorms are deferred to the epilogue.
    # NOTE: gate slices assume H is lane-friendly (multiple of 128 in prod);
    # smaller H is correct but uses masked lane slices.
    h = h_scr[...]
    c = c_scr[...]
    for t in range(TT):
        gates = gx[t * Bq:(t + 1) * Bq] + jnp.dot(
            h.astype(MXU_DTYPE), whht, preferred_element_type=jnp.float32)
        i = jax.nn.sigmoid(gates[:, 0 * H:1 * H])
        f = jax.nn.sigmoid(gates[:, 1 * H:2 * H])
        g = jnp.tanh(gates[:, 2 * H:3 * H])
        o = jax.nn.sigmoid(gates[:, 3 * H:4 * H])
        c = f * c + i * g
        h = o * jnp.tanh(c)
        hblk_scr[t] = h                            # bound vreg live ranges
    h_scr[...] = h
    c_scr[...] = c

    # Deferred LayerNorm_1 + residual + LayerNorm_2, written directly in
    # (B, T, H) layout (no XLA output transpose afterwards).
    ln1w, ln1b = ln1w_ref[...], ln1b_ref[...]
    ln2w, ln2b = ln2w_ref[...], ln2b_ref[...]
    for t in range(TT):
        y1 = _layernorm(hblk_scr[t], ln1w, ln1b) + fc2[t * Bq:(t + 1) * Bq]
        y_ref[:, t, :] = _layernorm(y1, ln2w, ln2b).astype(y_ref.dtype)


# ---------------------------------------------------------------------------
# Wrapper
# ---------------------------------------------------------------------------
def lstm_block_forward(x, params):
    """x: (B, T, input_dim) float32 -> (B, T, lstm_dim) float32."""
    B, T, Din = x.shape
    Dlin = params["w1"].shape[0]
    H = params["w2"].shape[0]

    vmem_limit = _vmem_limit_bytes()
    TT = _pick_tt(T, B, H, vmem_limit)             # timesteps per kernel-2 block
    T_pad = TT * pl.cdiv(T, TT)                    # pad ragged T instead of TT=1
    if T_pad != T:
        x = jnp.pad(x, ((0, 0), (0, T_pad - T), (0, 0)))
    N = T_pad * B

    # Time-major once at the (small, Din-wide) input so kernel 1 writes fc in
    # the row order the recurrence consumes.
    x_tm = jnp.transpose(x, (1, 0, 2)).reshape(N, Din)

    # bf16 matmul operands (halves weight DMA, ~2x MXU throughput).
    w1t = params["w1"].T.astype(MXU_DTYPE)
    w2t = params["w2"].T.astype(MXU_DTYPE)
    wiht = params["w_ih"].T.astype(MXU_DTYPE)
    whht = params["w_hh"].T.astype(MXU_DTYPE)
    bias = (params["b_ih"] + params["b_hh"])[None, :].astype(jnp.float32)

    smem_spec = pl.BlockSpec(memory_space=pltpu.MemorySpace.SMEM)

    # ---- Kernel 1: row-tiled FC block ---------------------------------------
    TM = min(N, 512)
    fc = pl.pallas_call(
        fc_block_kernel,
        grid=(pl.cdiv(N, TM),),
        in_specs=[
            pl.BlockSpec((TM, Din), lambda i: (i, 0)),       # x rows
            pl.BlockSpec((Din, Dlin), lambda i: (0, 0)),     # W1^T (bf16)
            pl.BlockSpec((1, Dlin), lambda i: (0, 0)),       # b1
            smem_spec,                                       # PReLU alpha 1 (SMEM)
            pl.BlockSpec((Dlin, H), lambda i: (0, 0)),       # W2^T (bf16)
            pl.BlockSpec((1, H), lambda i: (0, 0)),          # b2
            smem_spec,                                       # PReLU alpha 2 (SMEM)
            pl.BlockSpec((1, H), lambda i: (0, 0)),          # ln0 weight
            pl.BlockSpec((1, H), lambda i: (0, 0)),          # ln0 bias
        ],
        out_specs=pl.BlockSpec((TM, H), lambda i: (i, 0)),
        out_shape=jax.ShapeDtypeStruct((N, H), jnp.float32),
        compiler_params=pltpu.CompilerParams(
            dimension_semantics=("parallel",),
            vmem_limit_bytes=vmem_limit),
    )(
        x_tm,
        w1t, params["b1"][None, :], params["prelu1"],
        w2t, params["b2"][None, :], params["prelu2"],
        params["ln0_w"][None, :], params["ln0_b"][None, :],
    )

    # ---- Kernel 2: recurrence over time blocks ------------------------------
    # Batch is NOT split: on single-TC v5e/v6e a batch split only shrinks the
    # already-skinny recurrence matmul and adds grid-step overhead.
    # TODO(synk): on v7x (2 TensorCores) shard the batch across cores when B
    # is sublane-divisible to use both cores for the recurrence.
    nT = T_pad // TT
    y = pl.pallas_call(
        lstm_block_kernel,
        grid=(nT,),
        in_specs=[
            pl.BlockSpec((TT * B, H), lambda t: (t, 0)),     # fc rows (time block)
            pl.BlockSpec((H, 4 * H), lambda t: (0, 0)),      # W_ih^T (bf16)
            pl.BlockSpec((1, 4 * H), lambda t: (0, 0)),      # b_ih + b_hh
            pl.BlockSpec((H, 4 * H), lambda t: (0, 0)),      # W_hh^T (bf16)
            pl.BlockSpec((1, H), lambda t: (0, 0)),          # ln1 weight
            pl.BlockSpec((1, H), lambda t: (0, 0)),          # ln1 bias
            pl.BlockSpec((1, H), lambda t: (0, 0)),          # ln2 weight
            pl.BlockSpec((1, H), lambda t: (0, 0)),          # ln2 bias
        ],
        out_specs=pl.BlockSpec((B, TT, H), lambda t: (0, t, 0)),
        out_shape=jax.ShapeDtypeStruct((B, T_pad, H), jnp.float32),
        scratch_shapes=[pltpu.VMEM((B, H), jnp.float32),     # h state
                        pltpu.VMEM((B, H), jnp.float32),     # c state
                        pltpu.VMEM((TT, B, H), jnp.float32)],  # per-step h
        compiler_params=pltpu.CompilerParams(
            dimension_semantics=("arbitrary",),
            vmem_limit_bytes=vmem_limit),
    )(
        fc, wiht, bias, whht,
        params["ln1_w"][None, :], params["ln1_b"][None, :],
        params["ln2_w"][None, :], params["ln2_b"][None, :],
    )

    if T_pad != T:
        y = y[:, :T, :]
    return y


# ---------------------------------------------------------------------------
# Pure-JAX reference (sanity check, f32 everywhere)
# ---------------------------------------------------------------------------
def ref_forward(x, p):
    h1 = x @ p["w1"].T + p["b1"]
    h1 = jnp.where(h1 >= 0, h1, p["prelu1"][0] * h1)
    h2 = h1 @ p["w2"].T + p["b2"]
    h2 = jnp.where(h2 >= 0, h2, p["prelu2"][0] * h2)
    xfc = _layernorm(h2, p["ln0_w"], p["ln0_b"])                # (B, T, H)

    B, T, H = xfc.shape
    wiht, whht = p["w_ih"].T, p["w_hh"].T
    bias = p["b_ih"] + p["b_hh"]

    def step(carry, x_t):
        h, c = carry
        gates = x_t @ wiht + h @ whht + bias
        i = jax.nn.sigmoid(gates[:, 0 * H:1 * H])
        f = jax.nn.sigmoid(gates[:, 1 * H:2 * H])
        g = jnp.tanh(gates[:, 2 * H:3 * H])
        o = jax.nn.sigmoid(gates[:, 3 * H:4 * H])
        c = f * c + i * g
        h = o * jnp.tanh(c)
        return (h, c), h

    init = (jnp.zeros((B, H), jnp.float32), jnp.zeros((B, H), jnp.float32))
    _, ys = jax.lax.scan(step, init, xfc.transpose(1, 0, 2))
    y = ys.transpose(1, 0, 2)
    y = _layernorm(y, p["ln1_w"], p["ln1_b"])
    y = y + xfc
    y = _layernorm(y, p["ln2_w"], p["ln2_b"])
    return y


# ---------------------------------------------------------------------------
def init_params(key, input_dim, linear_dim, lstm_dim):
    ks = jax.random.split(key, 8)
    u = lambda k, shape, fan: jax.random.uniform(
        k, shape, jnp.float32, -1.0 / jnp.sqrt(fan), 1.0 / jnp.sqrt(fan))
    return {
        "w1": u(ks[0], (linear_dim, input_dim), input_dim),
        "b1": u(ks[1], (linear_dim,), input_dim),
        "prelu1": jnp.array([0.25], jnp.float32),
        "w2": u(ks[2], (lstm_dim, linear_dim), linear_dim),
        "b2": u(ks[3], (lstm_dim,), linear_dim),
        "prelu2": jnp.array([0.25], jnp.float32),
        "ln0_w": jnp.ones((lstm_dim,), jnp.float32),
        "ln0_b": jnp.zeros((lstm_dim,), jnp.float32),
        "w_ih": u(ks[4], (4 * lstm_dim, lstm_dim), lstm_dim),
        "w_hh": u(ks[5], (4 * lstm_dim, lstm_dim), lstm_dim),
        "b_ih": u(ks[6], (4 * lstm_dim,), lstm_dim),
        "b_hh": u(ks[7], (4 * lstm_dim,), lstm_dim),
        "ln1_w": jnp.ones((lstm_dim,), jnp.float32),
        "ln1_b": jnp.zeros((lstm_dim,), jnp.float32),
        "ln2_w": jnp.ones((lstm_dim,), jnp.float32),
        "ln2_b": jnp.zeros((lstm_dim,), jnp.float32),
    }


if __name__ == "__main__":
    B, T, INPUT_DIM, LINEAR_DIM, LSTM_DIM = 2, 8, 16, 32, 32

    key = jax.random.PRNGKey(0)
    kx, kp = jax.random.split(key)
    x = jax.random.normal(kx, (B, T, INPUT_DIM), jnp.float32)
    params = init_params(kp, INPUT_DIM, LINEAR_DIM, LSTM_DIM)

    y = jax.jit(lstm_block_forward)(x, params)
    y = jax.block_until_ready(y)

    y_ref = ref_forward(x, params)
    assert y.shape == (B, T, LSTM_DIM)
    # bf16 MXU operands (f32 accumulation) -> ~1e-2-level agreement vs the
    # all-f32 reference; tolerance widened accordingly.
    assert jnp.allclose(y, y_ref, atol=5e-2, rtol=5e-2), "mismatch vs reference"

    print("KERNEL_OK")
</pallas_src>

<mosaic_0001>
module attributes {stable_mosaic.version = 11 : i64} {
  func.func @fc_block_kernel(%arg0: i32, %arg1: memref<16x16xf32, #tpu.memory_space<vmem>>, %arg2: memref<16x32xbf16, #tpu.memory_space<vmem>>, %arg3: memref<1x32xf32, #tpu.memory_space<vmem>>, %arg4: memref<1xf32, #tpu.memory_space<smem>>, %arg5: memref<32x32xbf16, #tpu.memory_space<vmem>>, %arg6: memref<1x32xf32, #tpu.memory_space<vmem>>, %arg7: memref<1xf32, #tpu.memory_space<smem>>, %arg8: memref<1x32xf32, #tpu.memory_space<vmem>>, %arg9: memref<1x32xf32, #tpu.memory_space<vmem>>, %arg10: memref<16x32xf32, #tpu.memory_space<vmem>>) attributes {dimension_semantics = [#tpu.dimension_semantics<parallel>], iteration_bounds = array<i64: 1>, scalar_prefetch = 0 : i64, scratch_operands = 0 : i64, tpu.core_type = #tpu.core_type<tc>, window_params = [{transform_indices = @transform_0, window_bounds = array<i64: 16, 16>}, {pipeline_mode = #tpu.pipeline_mode<synchronous>, transform_indices = @transform_1, window_bounds = array<i64: 16, 32>}, {pipeline_mode = #tpu.pipeline_mode<synchronous>, transform_indices = @transform_2, window_bounds = array<i64: 1, 32>}, {transform_indices = @transform_3, window_bounds = array<i64: 1>}, {pipeline_mode = #tpu.pipeline_mode<synchronous>, transform_indices = @transform_4, window_bounds = array<i64: 32, 32>}, {pipeline_mode = #tpu.pipeline_mode<synchronous>, transform_indices = @transform_5, window_bounds = array<i64: 1, 32>}, {transform_indices = @transform_6, window_bounds = array<i64: 1>}, {pipeline_mode = #tpu.pipeline_mode<synchronous>, transform_indices = @transform_7, window_bounds = array<i64: 1, 32>}, {pipeline_mode = #tpu.pipeline_mode<synchronous>, transform_indices = @transform_8, window_bounds = array<i64: 1, 32>}, {transform_indices = @transform_9, window_bounds = array<i64: 16, 32>}]} {
    %c0 = arith.constant 0 : index
    %c0_0 = arith.constant 0 : index
    %0 = vector.load %arg1[%c0, %c0_0] : memref<16x16xf32, #tpu.memory_space<vmem>>, vector<16x16xf32>
    %1 = arith.truncf %0 : vector<16x16xf32> to vector<16x16xbf16>
    %c0_1 = arith.constant 0 : index
    %c0_2 = arith.constant 0 : index
    %2 = vector.load %arg2[%c0_1, %c0_2] : memref<16x32xbf16, #tpu.memory_space<vmem>>, vector<16x32xbf16>
    %cst = arith.constant dense<0.000000e+00> : vector<16x32xf32>
    %3 = tpu.matmul %1, %2, %cst {dimension_numbers = #tpu.dot_dimension_numbers<[1], [0], [0], [1], [0, 0, 1, 1], [], []>} : vector<16x16xbf16>, vector<16x32xbf16>, vector<16x32xf32> -> vector<16x32xf32>
    %c0_3 = arith.constant 0 : index
    %c0_4 = arith.constant 0 : index
    %4 = vector.load %arg3[%c0_3, %c0_4] : memref<1x32xf32, #tpu.memory_space<vmem>>, vector<1x32xf32>
    %5 = vector.broadcast %4 : vector<1x32xf32> to vector<16x32xf32>
    %6 = arith.addf %3, %5 : vector<16x32xf32>
    %c0_5 = arith.constant 0 : index
    %7 = memref.load %arg4[%c0_5] : memref<1xf32, #tpu.memory_space<smem>>
    %cst_6 = arith.constant 0.000000e+00 : f32
    %8 = vector.broadcast %cst_6 : f32 to vector<16x32xf32>
    %9 = arith.cmpf oge, %6, %8 : vector<16x32xf32>
    %10 = vector.broadcast %7 : f32 to vector<16x32xf32>
    %11 = arith.mulf %10, %6 : vector<16x32xf32>
    %12 = arith.select %9, %6, %11 : vector<16x32xi1>, vector<16x32xf32>
    %13 = arith.truncf %12 : vector<16x32xf32> to vector<16x32xbf16>
    %c0_7 = arith.constant 0 : index
    %c0_8 = arith.constant 0 : index
    %14 = vector.load %arg5[%c0_7, %c0_8] : memref<32x32xbf16, #tpu.memory_space<vmem>>, vector<32x32xbf16>
    %cst_9 = arith.constant dense<0.000000e+00> : vector<16x32xf32>
    %15 = tpu.matmul %13, %14, %cst_9 {dimension_numbers = #tpu.dot_dimension_numbers<[1], [0], [0], [1], [0, 0, 1, 1], [], []>} : vector<16x32xbf16>, vector<32x32xbf16>, vector<16x32xf32> -> vector<16x32xf32>
    %c0_10 = arith.constant 0 : index
    %c0_11 = arith.constant 0 : index
    %16 = vector.load %arg6[%c0_10, %c0_11] : memref<1x32xf32, #tpu.memory_space<vmem>>, vector<1x32xf32>
    %17 = vector.broadcast %16 : vector<1x32xf32> to vector<16x32xf32>
    %18 = arith.addf %15, %17 : vector<16x32xf32>
    %c0_12 = arith.constant 0 : index
    %19 = memref.load %arg7[%c0_12] : memref<1xf32, #tpu.memory_space<smem>>
    %cst_13 = arith.constant 0.000000e+00 : f32
    %20 = vector.broadcast %cst_13 : f32 to vector<16x32xf32>
    %21 = arith.cmpf oge, %18, %20 : vector<16x32xf32>
    %22 = vector.broadcast %19 : f32 to vector<16x32xf32>
    %23 = arith.mulf %22, %18 : vector<16x32xf32>
    %24 = arith.select %21, %18, %23 : vector<16x32xi1>, vector<16x32xf32>
    %c0_14 = arith.constant 0 : index
    %c0_15 = arith.constant 0 : index
    %25 = vector.load %arg8[%c0_14, %c0_15] : memref<1x32xf32, #tpu.memory_space<vmem>>, vector<1x32xf32>
    %c0_16 = arith.constant 0 : index
    %c0_17 = arith.constant 0 : index
    %26 = vector.load %arg9[%c0_16, %c0_17] : memref<1x32xf32, #tpu.memory_space<vmem>>, vector<1x32xf32>
    %cst_18 = arith.constant dense<0.000000e+00> : vector<16xf32>
    %27 = vector.multi_reduction <add>, %24, %cst_18 [1] : vector<16x32xf32> to vector<16xf32>
    %28 = vector.shape_cast %27 : vector<16xf32> to vector<16x1xf32>
    %cst_19 = arith.constant 3.200000e+01 : f32
    %29 = vector.broadcast %cst_19 : f32 to vector<16x1xf32>
    %30 = arith.divf %28, %29 : vector<16x1xf32>
    %31 = vector.broadcast %30 : vector<16x1xf32> to vector<16x32xf32>
    %32 = arith.subf %24, %31 : vector<16x32xf32>
    %33 = arith.mulf %32, %32 : vector<16x32xf32>
    %cst_20 = arith.constant dense<0.000000e+00> : vector<16xf32>
    %34 = vector.multi_reduction <add>, %33, %cst_20 [1] : vector<16x32xf32> to vector<16xf32>
    %35 = vector.shape_cast %34 : vector<16xf32> to vector<16x1xf32>
    %cst_21 = arith.constant 3.200000e+01 : f32
    %36 = vector.broadcast %cst_21 : f32 to vector<16x1xf32>
    %37 = arith.divf %35, %36 : vector<16x1xf32>
    %38 = vector.broadcast %30 : vector<16x1xf32> to vector<16x32xf32>
    %39 = arith.subf %24, %38 : vector<16x32xf32>
    %cst_22 = arith.constant 9.99999974E-6 : f32
    %40 = vector.broadcast %cst_22 : f32 to vector<16x1xf32>
    %41 = arith.addf %37, %40 : vector<16x1xf32>
    %42 = math.rsqrt %41 : vector<16x1xf32>
    %43 = vector.broadcast %42 : vector<16x1xf32> to vector<16x32xf32>
    %44 = arith.mulf %39, %43 : vector<16x32xf32>
    %45 = vector.broadcast %25 : vector<1x32xf32> to vector<16x32xf32>
    %46 = arith.mulf %44, %45 : vector<16x32xf32>
    %47 = vector.broadcast %26 : vector<1x32xf32> to vector<16x32xf32>
    %48 = arith.addf %46, %47 : vector<16x32xf32>
    %c0_23 = arith.constant 0 : index
    %c0_24 = arith.constant 0 : index
    %49 = vector.load %arg10[%c0_23, %c0_24] : memref<16x32xf32, #tpu.memory_space<vmem>>, vector<16x32xf32>
    tpu.vector_store %arg10[%c0_23, %c0_24], %48 {strides = array<i32>} : memref<16x32xf32, #tpu.memory_space<vmem>>, vector<16x32xf32>,
    return
  }
  func.func @transform_0(%arg0: i32) -> (i32, i32) {
    %c0_i32 = arith.constant 0 : i32
    %c0_i32_0 = arith.constant 0 : i32
    return %arg0, %c0_i32 : i32, i32
  }
  func.func @transform_1(%arg0: i32) -> (i32, i32) {
    %c0_i32 = arith.constant 0 : i32
    %c0_i32_0 = arith.constant 0 : i32
    %c0_i32_1 = arith.constant 0 : i32
    return %c0_i32, %c0_i32_0 : i32, i32
  }
  func.func @transform_2(%arg0: i32) -> (i32, i32) {
    %c0_i32 = arith.constant 0 : i32
    %c0_i32_0 = arith.constant 0 : i32
    %c0_i32_1 = arith.constant 0 : i32
    return %c0_i32, %c0_i32_0 : i32, i32
  }
  func.func @transform_3(%arg0: i32) -> i32 {
    %c0_i32 = arith.constant 0 : i32
    %c0_i32_0 = arith.constant 0 : i32
    return %c0_i32 : i32
  }
  func.func @transform_4(%arg0: i32) -> (i32, i32) {
    %c0_i32 = arith.constant 0 : i32
    %c0_i32_0 = arith.constant 0 : i32
    %c0_i32_1 = arith.constant 0 : i32
    return %c0_i32, %c0_i32_0 : i32, i32
  }
  func.func @transform_5(%arg0: i32) -> (i32, i32) {
    %c0_i32 = arith.constant 0 : i32
    %c0_i32_0 = arith.constant 0 : i32
    %c0_i32_1 = arith.constant 0 : i32
    return %c0_i32, %c0_i32_0 : i32, i32
  }
  func.func @transform_6(%arg0: i32) -> i32 {
    %c0_i32 = arith.constant 0 : i32
    %c0_i32_0 = arith.constant 0 : i32
    return %c0_i32 : i32
  }
  func.func @transform_7(%arg0: i32) -> (i32, i32) {
    %c0_i32 = arith.constant 0 : i32
    %c0_i32_0 = arith.constant 0 : i32
    %c0_i32_1 = arith.constant 0 : i32
    return %c0_i32, %c0_i32_0 : i32, i32
  }
  func.func @transform_8(%arg0: i32) -> (i32, i32) {
    %c0_i32 = arith.constant 0 : i32
    %c0_i32_0 = arith.constant 0 : i32
    %c0_i32_1 = arith.constant 0 : i32
    return %c0_i32, %c0_i32_0 : i32, i32
  }
  func.func @transform_9(%arg0: i32) -> (i32, i32) {
    %c0_i32 = arith.constant 0 : i32
    %c0_i32_0 = arith.constant 0 : i32
    return %arg0, %c0_i32 : i32, i32
  }
}

module attributes {stable_mosaic.version = 11 : i64} {
  func.func @lstm_block_kernel(%arg0: i32, %arg1: memref<16x32xf32, #tpu.memory_space<vmem>>, %arg2: memref<32x128xbf16, #tpu.memory_space<vmem>>, %arg3: memref<1x128xf32, #tpu.memory_space<vmem>>, %arg4: memref<32x128xbf16, #tpu.memory_space<vmem>>, %arg5: memref<1x32xf32, #tpu.memory_space<vmem>>, %arg6: memref<1x32xf32, #tpu.memory_space<vmem>>, %arg7: memref<1x32xf32, #tpu.memory_space<vmem>>, %arg8: memref<1x32xf32, #tpu.memory_space<vmem>>, %arg9: memref<2x8x32xf32, #tpu.memory_space<vmem>>, %arg10: memref<2x32xf32, #tpu.memory_space<vmem>>, %arg11: memref<2x32xf32, #tpu.memory_space<vmem>>, %arg12: memref<8x2x32xf32, #tpu.memory_space<vmem>>) attributes {dimension_semantics = [#tpu.dimension_semantics<arbitrary>], iteration_bounds = array<i64: 1>, scalar_prefetch = 0 : i64, scratch_operands = 3 : i64, tpu.core_type = #tpu.core_type<tc>, window_params = [{transform_indices = @transform_0, window_bounds = array<i64: 16, 32>}, {pipeline_mode = #tpu.pipeline_mode<synchronous>, transform_indices = @transform_1, window_bounds = array<i64: 32, 128>}, {pipeline_mode = #tpu.pipeline_mode<synchronous>, transform_indices = @transform_2, window_bounds = array<i64: 1, 128>}, {pipeline_mode = #tpu.pipeline_mode<synchronous>, transform_indices = @transform_3, window_bounds = array<i64: 32, 128>}, {pipeline_mode = #tpu.pipeline_mode<synchronous>, transform_indices = @transform_4, window_bounds = array<i64: 1, 32>}, {pipeline_mode = #tpu.pipeline_mode<synchronous>, transform_indices = @transform_5, window_bounds = array<i64: 1, 32>}, {pipeline_mode = #tpu.pipeline_mode<synchronous>, transform_indices = @transform_6, window_bounds = array<i64: 1, 32>}, {pipeline_mode = #tpu.pipeline_mode<synchronous>, transform_indices = @transform_7, window_bounds = array<i64: 1, 32>}, {transform_indices = @transform_8, window_bounds = array<i64: 2, 8, 32>}]} {
    %c0_i32 = arith.constant 0 : i32
    %0 = arith.cmpi eq, %arg0, %c0_i32 : i32
    %1 = arith.extui %0 : i1 to i32
    %c0_i32_0 = arith.constant 0 : i32
    %2 = arith.cmpi ne, %1, %c0_i32_0 : i32
    scf.if %2 {
      %cst_201 = arith.constant 0.000000e+00 : f32
      %683 = vector.broadcast %cst_201 : f32 to vector<2x32xf32>
      %c0_202 = arith.constant 0 : index
      %c0_203 = arith.constant 0 : index
      %684 = vector.load %arg10[%c0_202, %c0_203] : memref<2x32xf32, #tpu.memory_space<vmem>>, vector<2x32xf32>
      tpu.vector_store %arg10[%c0_202, %c0_203], %683 {strides = array<i32>} : memref<2x32xf32, #tpu.memory_space<vmem>>, vector<2x32xf32>,
      %cst_204 = arith.constant 0.000000e+00 : f32
      %685 = vector.broadcast %cst_204 : f32 to vector<2x32xf32>
      %c0_205 = arith.constant 0 : index
      %c0_206 = arith.constant 0 : index
      %686 = vector.load %arg11[%c0_205, %c0_206] : memref<2x32xf32, #tpu.memory_space<vmem>>, vector<2x32xf32>
      tpu.vector_store %arg11[%c0_205, %c0_206], %685 {strides = array<i32>} : memref<2x32xf32, #tpu.memory_space<vmem>>, vector<2x32xf32>,
    } else {
    }
    %c0 = arith.constant 0 : index
    %c0_1 = arith.constant 0 : index
    %3 = vector.load %arg1[%c0, %c0_1] : memref<16x32xf32, #tpu.memory_space<vmem>>, vector<16x32xf32>
    %c0_2 = arith.constant 0 : index
    %c0_3 = arith.constant 0 : index
    %4 = vector.load %arg2[%c0_2, %c0_3] : memref<32x128xbf16, #tpu.memory_space<vmem>>, vector<32x128xbf16>
    %c0_4 = arith.constant 0 : index
    %c0_5 = arith.constant 0 : index
    %5 = vector.load %arg4[%c0_4, %c0_5] : memref<32x128xbf16, #tpu.memory_space<vmem>>, vector<32x128xbf16>
    %6 = arith.truncf %3 : vector<16x32xf32> to vector<16x32xbf16>
    %cst = arith.constant dense<0.000000e+00> : vector<16x128xf32>
    %7 = tpu.matmul %6, %4, %cst {dimension_numbers = #tpu.dot_dimension_numbers<[1], [0], [0], [1], [0, 0, 1, 1], [], []>} : vector<16x32xbf16>, vector<32x128xbf16>, vector<16x128xf32> -> vector<16x128xf32>
    %c0_6 = arith.constant 0 : index
    %c0_7 = arith.constant 0 : index
    %8 = vector.load %arg3[%c0_6, %c0_7] : memref<1x128xf32, #tpu.memory_space<vmem>>, vector<1x128xf32>
    %9 = vector.broadcast %8 : vector<1x128xf32> to vector<16x128xf32>
    %10 = arith.addf %7, %9 : vector<16x128xf32>
    %c0_8 = arith.constant 0 : index
    %c0_9 = arith.constant 0 : index
    %11 = vector.load %arg10[%c0_8, %c0_9] : memref<2x32xf32, #tpu.memory_space<vmem>>, vector<2x32xf32>
    %c0_10 = arith.constant 0 : index
    %c0_11 = arith.constant 0 : index
    %12 = vector.load %arg11[%c0_10, %c0_11] : memref<2x32xf32, #tpu.memory_space<vmem>>, vector<2x32xf32>
    %13 = vector.extract_strided_slice %10 {offsets = [0, 0], sizes = [2, 128], strides = [1, 1]} : vector<16x128xf32> to vector<2x128xf32>
    %14 = arith.truncf %11 : vector<2x32xf32> to vector<2x32xbf16>
    %cst_12 = arith.constant dense<0.000000e+00> : vector<2x128xf32>
    %15 = tpu.matmul %14, %5, %cst_12 {dimension_numbers = #tpu.dot_dimension_numbers<[1], [0], [0], [1], [0, 0, 1, 1], [], []>} : vector<2x32xbf16>, vector<32x128xbf16>, vector<2x128xf32> -> vector<2x128xf32>
    %16 = arith.addf %13, %15 : vector<2x128xf32>
    %17 = vector.extract_strided_slice %16 {offsets = [0, 0], sizes = [2, 32], strides = [1, 1]} : vector<2x128xf32> to vector<2x32xf32>
    %18 = arith.negf %17 : vector<2x32xf32>
    %19 = math.exp %18 : vector<2x32xf32>
    %cst_13 = arith.constant 1.000000e+00 : f32
    %20 = vector.broadcast %cst_13 : f32 to vector<2x32xf32>
    %21 = arith.addf %20, %19 : vector<2x32xf32>
    %22 = arith.divf %20, %21 : vector<2x32xf32>
    %23 = vector.extract_strided_slice %16 {offsets = [0, 32], sizes = [2, 32], strides = [1, 1]} : vector<2x128xf32> to vector<2x32xf32>
    %24 = arith.negf %23 : vector<2x32xf32>
    %25 = math.exp %24 : vector<2x32xf32>
    %cst_14 = arith.constant 1.000000e+00 : f32
    %26 = vector.broadcast %cst_14 : f32 to vector<2x32xf32>
    %27 = arith.addf %26, %25 : vector<2x32xf32>
    %28 = arith.divf %26, %27 : vector<2x32xf32>
    %29 = vector.extract_strided_slice %16 {offsets = [0, 64], sizes = [2, 32], strides = [1, 1]} : vector<2x128xf32> to vector<2x32xf32>
    %30 = math.tanh %29 : vector<2x32xf32>
    %31 = vector.extract_strided_slice %16 {offsets = [0, 96], sizes = [2, 32], strides = [1, 1]} : vector<2x128xf32> to vector<2x32xf32>
    %32 = arith.negf %31 : vector<2x32xf32>
    %33 = math.exp %32 : vector<2x32xf32>
    %cst_15 = arith.constant 1.000000e+00 : f32
    %34 = vector.broadcast %cst_15 : f32 to vector<2x32xf32>
    %35 = arith.addf %34, %33 : vector<2x32xf32>
    %36 = arith.divf %34, %35 : vector<2x32xf32>
    %37 = arith.mulf %28, %12 : vector<2x32xf32>
    %38 = arith.mulf %22, %30 : vector<2x32xf32>
    %39 = arith.addf %37, %38 : vector<2x32xf32>
    %40 = math.tanh %39 : vector<2x32xf32>
    %41 = arith.mulf %36, %40 : vector<2x32xf32>
    %c0_16 = arith.constant 0 : index
    %c0_17 = arith.constant 0 : index
    %c0_18 = arith.constant 0 : index
    %42 = vector.load %arg12[%c0_16, %c0_17, %c0_18] : memref<8x2x32xf32, #tpu.memory_space<vmem>>, vector<1x2x32xf32>
    %43 = vector.shape_cast %42 : vector<1x2x32xf32> to vector<2x32xf32>
    %44 = vector.shape_cast %41 : vector<2x32xf32> to vector<1x2x32xf32>
    tpu.vector_store %arg12[%c0_16, %c0_17, %c0_18], %44 {strides = array<i32>} : memref<8x2x32xf32, #tpu.memory_space<vmem>>, vector<1x2x32xf32>,
    %45 = vector.extract_strided_slice %10 {offsets = [2, 0], sizes = [2, 128], strides = [1, 1]} : vector<16x128xf32> to vector<2x128xf32>
    %46 = arith.truncf %41 : vector<2x32xf32> to vector<2x32xbf16>
    %cst_19 = arith.constant dense<0.000000e+00> : vector<2x128xf32>
    %47 = tpu.matmul %46, %5, %cst_19 {dimension_numbers = #tpu.dot_dimension_numbers<[1], [0], [0], [1], [0, 0, 1, 1], [], []>} : vector<2x32xbf16>, vector<32x128xbf16>, vector<2x128xf32> -> vector<2x128xf32>
    %48 = arith.addf %45, %47 : vector<2x128xf32>
    %49 = vector.extract_strided_slice %48 {offsets = [0, 0], sizes = [2, 32], strides = [1, 1]} : vector<2x128xf32> to vector<2x32xf32>
    %50 = arith.negf %49 : vector<2x32xf32>
    %51 = math.exp %50 : vector<2x32xf32>
    %cst_20 = arith.constant 1.000000e+00 : f32
    %52 = vector.broadcast %cst_20 : f32 to vector<2x32xf32>
    %53 = arith.addf %52, %51 : vector<2x32xf32>
    %54 = arith.divf %52, %53 : vector<2x32xf32>
    %55 = vector.extract_strided_slice %48 {offsets = [0, 32], sizes = [2, 32], strides = [1, 1]} : vector<2x128xf32> to vector<2x32xf32>
    %56 = arith.negf %55 : vector<2x32xf32>
    %57 = math.exp %56 : vector<2x32xf32>
    %cst_21 = arith.constant 1.000000e+00 : f32
    %58 = vector.broadcast %cst_21 : f32 to vector<2x32xf32>
    %59 = arith.addf %58, %57 : vector<2x32xf32>
    %60 = arith.divf %58, %59 : vector<2x32xf32>
    %61 = vector.extract_strided_slice %48 {offsets = [0, 64], sizes = [2, 32], strides = [1, 1]} : vector<2x128xf32> to vector<2x32xf32>
    %62 = math.tanh %61 : vector<2x32xf32>
    %63 = vector.extract_strided_slice %48 {offsets = [0, 96], sizes = [2, 32], strides = [1, 1]} : vector<2x128xf32> to vector<2x32xf32>
    %64 = arith.negf %63 : vector<2x32xf32>
    %65 = math.exp %64 : vector<2x32xf32>
    %cst_22 = arith.constant 1.000000e+00 : f32
    %66 = vector.broadcast %cst_22 : f32 to vector<2x32xf32>
    %67 = arith.addf %66, %65 : vector<2x32xf32>
    %68 = arith.divf %66, %67 : vector<2x32xf32>
    %69 = arith.mulf %60, %39 : vector<2x32xf32>
    %70 = arith.mulf %54, %62 : vector<2x32xf32>
    %71 = arith.addf %69, %70 : vector<2x32xf32>
    %72 = math.tanh %71 : vector<2x32xf32>
    %73 = arith.mulf %68, %72 : vector<2x32xf32>
    %c1 = arith.constant 1 : index
    %c0_23 = arith.constant 0 : index
    %c0_24 = arith.constant 0 : index
    %74 = vector.load %arg12[%c1, %c0_23, %c0_24] : memref<8x2x32xf32, #tpu.memory_space<vmem>>, vector<1x2x32xf32>
    %75 = vector.shape_cast %74 : vector<1x2x32xf32> to vector<2x32xf32>
    %76 = vector.shape_cast %73 : vector<2x32xf32> to vector<1x2x32xf32>
    tpu.vector_store %arg12[%c1, %c0_23, %c0_24], %76 {strides = array<i32>} : memref<8x2x32xf32, #tpu.memory_space<vmem>>, vector<1x2x32xf32>,
    %77 = vector.extract_strided_slice %10 {offsets = [4, 0], sizes = [2, 128], strides = [1, 1]} : vector<16x128xf32> to vector<2x128xf32>
    %78 = arith.truncf %73 : vector<2x32xf32> to vector<2x32xbf16>
    %cst_25 = arith.constant dense<0.000000e+00> : vector<2x128xf32>
    %79 = tpu.matmul %78, %5, %cst_25 {dimension_numbers = #tpu.dot_dimension_numbers<[1], [0], [0], [1], [0, 0, 1, 1], [], []>} : vector<2x32xbf16>, vector<32x128xbf16>, vector<2x128xf32> -> vector<2x128xf32>
    %80 = arith.addf %77, %79 : vector<2x128xf32>
    %81 = vector.extract_strided_slice %80 {offsets = [0, 0], sizes = [2, 32], strides = [1, 1]} : vector<2x128xf32> to vector<2x32xf32>
    %82 = arith.negf %81 : vector<2x32xf32>
    %83 = math.exp %82 : vector<2x32xf32>
    %cst_26 = arith.constant 1.000000e+00 : f32
    %84 = vector.broadcast %cst_26 : f32 to vector<2x32xf32>
    %85 = arith.addf %84, %83 : vector<2x32xf32>
    %86 = arith.divf %84, %85 : vector<2x32xf32>
    %87 = vector.extract_strided_slice %80 {offsets = [0, 32], sizes = [2, 32], strides = [1, 1]} : vector<2x128xf32> to vector<2x32xf32>
    %88 = arith.negf %87 : vector<2x32xf32>
    %89 = math.exp %88 : vector<2x32xf32>
    %cst_27 = arith.constant 1.000000e+00 : f32
    %90 = vector.broadcast %cst_27 : f32 to vector<2x32xf32>
    %91 = arith.addf %90, %89 : vector<2x32xf32>
    %92 = arith.divf %90, %91 : vector<2x32xf32>
    %93 = vector.extract_strided_slice %80 {offsets = [0, 64], sizes = [2, 32], strides = [1, 1]} : vector<2x128xf32> to vector<2x32xf32>
    %94 = math.tanh %93 : vector<2x32xf32>
    %95 = vector.extract_strided_slice %80 {offsets = [0, 96], sizes = [2, 32], strides = [1, 1]} : vector<2x128xf32> to vector<2x32xf32>
    %96 = arith.negf %95 : vector<2x32xf32>
    %97 = math.exp %96 : vector<2x32xf32>
    %cst_28 = arith.constant 1.000000e+00 : f32
    %98 = vector.broadcast %cst_28 : f32 to vector<2x32xf32>
    %99 = arith.addf %98, %97 : vector<2x32xf32>
    %100 = arith.divf %98, %99 : vector<2x32xf32>
    %101 = arith.mulf %92, %71 : vector<2x32xf32>
    %102 = arith.mulf %86, %94 : vector<2x32xf32>
    %103 = arith.addf %101, %102 : vector<2x32xf32>
    %104 = math.tanh %103 : vector<2x32xf32>
    %105 = arith.mulf %100, %104 : vector<2x32xf32>
    %c2 = arith.constant 2 : index
    %c0_29 = arith.constant 0 : index
    %c0_30 = arith.constant 0 : index
    %106 = vector.load %arg12[%c2, %c0_29, %c0_30] : memref<8x2x32xf32, #tpu.memory_space<vmem>>, vector<1x2x32xf32>
    %107 = vector.shape_cast %106 : vector<1x2x32xf32> to vector<2x32xf32>
    %108 = vector.shape_cast %105 : vector<2x32xf32> to vector<1x2x32xf32>
    tpu.vector_store %arg12[%c2, %c0_29, %c0_30], %108 {strides = array<i32>} : memref<8x2x32xf32, #tpu.memory_space<vmem>>, vector<1x2x32xf32>,
    %109 = vector.extract_strided_slice %10 {offsets = [6, 0], sizes = [2, 128], strides = [1, 1]} : vector<16x128xf32> to vector<2x128xf32>
    %110 = arith.truncf %105 : vector<2x32xf32> to vector<2x32xbf16>
    %cst_31 = arith.constant dense<0.000000e+00> : vector<2x128xf32>
    %111 = tpu.matmul %110, %5, %cst_31 {dimension_numbers = #tpu.dot_dimension_numbers<[1], [0], [0], [1], [0, 0, 1, 1], [], []>} : vector<2x32xbf16>, vector<32x128xbf16>, vector<2x128xf32> -> vector<2x128xf32>
    %112 = arith.addf %109, %111 : vector<2x128xf32>
    %113 = vector.extract_strided_slice %112 {offsets = [0, 0], sizes = [2, 32], strides = [1, 1]} : vector<2x128xf32> to vector<2x32xf32>
    %114 = arith.negf %113 : vector<2x32xf32>
    %115 = math.exp %114 : vector<2x32xf32>
    %cst_32 = arith.constant 1.000000e+00 : f32
    %116 = vector.broadcast %cst_32 : f32 to vector<2x32xf32>
    %117 = arith.addf %116, %115 : vector<2x32xf32>
    %118 = arith.divf %116, %117 : vector<2x32xf32>
    %119 = vector.extract_strided_slice %112 {offsets = [0, 32], sizes = [2, 32], strides = [1, 1]} : vector<2x128xf32> to vector<2x32xf32>
    %120 = arith.negf %119 : vector<2x32xf32>
    %121 = math.exp %120 : vector<2x32xf32>
    %cst_33 = arith.constant 1.000000e+00 : f32
    %122 = vector.broadcast %cst_33 : f32 to vector<2x32xf32>
    %123 = arith.addf %122, %121 : vector<2x32xf32>
    %124 = arith.divf %122, %123 : vector<2x32xf32>
    %125 = vector.extract_strided_slice %112 {offsets = [0, 64], sizes = [2, 32], strides = [1, 1]} : vector<2x128xf32> to vector<2x32xf32>
    %126 = math.tanh %125 : vector<2x32xf32>
    %127 = vector.extract_strided_slice %112 {offsets = [0, 96], sizes = [2, 32], strides = [1, 1]} : vector<2x128xf32> to vector<2x32xf32>
    %128 = arith.negf %127 : vector<2x32xf32>
    %129 = math.exp %128 : vector<2x32xf32>
    %cst_34 = arith.constant 1.000000e+00 : f32
    %130 = vector.broadcast %cst_34 : f32 to vector<2x32xf32>
    %131 = arith.addf %130, %129 : vector<2x32xf32>
    %132 = arith.divf %130, %131 : vector<2x32xf32>
    %133 = arith.mulf %124, %103 : vector<2x32xf32>
    %134 = arith.mulf %118, %126 : vector<2x32xf32>
    %135 = arith.addf %133, %134 : vector<2x32xf32>
    %136 = math.tanh %135 : vector<2x32xf32>
    %137 = arith.mulf %132, %136 : vector<2x32xf32>
    %c3 = arith.constant 3 : index
    %c0_35 = arith.constant 0 : index
    %c0_36 = arith.constant 0 : index
    %138 = vector.load %arg12[%c3, %c0_35, %c0_36] : memref<8x2x32xf32, #tpu.memory_space<vmem>>, vector<1x2x32xf32>
    %139 = vector.shape_cast %138 : vector<1x2x32xf32> to vector<2x32xf32>
    %140 = vector.shape_cast %137 : vector<2x32xf32> to vector<1x2x32xf32>
    tpu.vector_store %arg12[%c3, %c0_35, %c0_36], %140 {strides = array<i32>} : memref<8x2x32xf32, #tpu.memory_space<vmem>>, vector<1x2x32xf32>,
    %141 = vector.extract_strided_slice %10 {offsets = [8, 0], sizes = [2, 128], strides = [1, 1]} : vector<16x128xf32> to vector<2x128xf32>
    %142 = arith.truncf %137 : vector<2x32xf32> to vector<2x32xbf16>
    %cst_37 = arith.constant dense<0.000000e+00> : vector<2x128xf32>
    %143 = tpu.matmul %142, %5, %cst_37 {dimension_numbers = #tpu.dot_dimension_numbers<[1], [0], [0], [1], [0, 0, 1, 1], [], []>} : vector<2x32xbf16>, vector<32x128xbf16>, vector<2x128xf32> -> vector<2x128xf32>
    %144 = arith.addf %141, %143 : vector<2x128xf32>
    %145 = vector.extract_strided_slice %144 {offsets = [0, 0], sizes = [2, 32], strides = [1, 1]} : vector<2x128xf32> to vector<2x32xf32>
    %146 = arith.negf %145 : vector<2x32xf32>
    %147 = math.exp %146 : vector<2x32xf32>
    %cst_38 = arith.constant 1.000000e+00 : f32
    %148 = vector.broadcast %cst_38 : f32 to vector<2x32xf32>
    %149 = arith.addf %148, %147 : vector<2x32xf32>
    %150 = arith.divf %148, %149 : vector<2x32xf32>
    %151 = vector.extract_strided_slice %144 {offsets = [0, 32], sizes = [2, 32], strides = [1, 1]} : vector<2x128xf32> to vector<2x32xf32>
    %152 = arith.negf %151 : vector<2x32xf32>
    %153 = math.exp %152 : vector<2x32xf32>
    %cst_39 = arith.constant 1.000000e+00 : f32
    %154 = vector.broadcast %cst_39 : f32 to vector<2x32xf32>
    %155 = arith.addf %154, %153 : vector<2x32xf32>
    %156 = arith.divf %154, %155 : vector<2x32xf32>
    %157 = vector.extract_strided_slice %144 {offsets = [0, 64], sizes = [2, 32], strides = [1, 1]} : vector<2x128xf32> to vector<2x32xf32>
    %158 = math.tanh %157 : vector<2x32xf32>
    %159 = vector.extract_strided_slice %144 {offsets = [0, 96], sizes = [2, 32], strides = [1, 1]} : vector<2x128xf32> to vector<2x32xf32>
    %160 = arith.negf %159 : vector<2x32xf32>
    %161 = math.exp %160 : vector<2x32xf32>
    %cst_40 = arith.constant 1.000000e+00 : f32
    %162 = vector.broadcast %cst_40 : f32 to vector<2x32xf32>
    %163 = arith.addf %162, %161 : vector<2x32xf32>
    %164 = arith.divf %162, %163 : vector<2x32xf32>
    %165 = arith.mulf %156, %135 : vector<2x32xf32>
    %166 = arith.mulf %150, %158 : vector<2x32xf32>
    %167 = arith.addf %165, %166 : vector<2x32xf32>
    %168 = math.tanh %167 : vector<2x32xf32>
    %169 = arith.mulf %164, %168 : vector<2x32xf32>
    %c4 = arith.constant 4 : index
    %c0_41 = arith.constant 0 : index
    %c0_42 = arith.constant 0 : index
    %170 = vector.load %arg12[%c4, %c0_41, %c0_42] : memref<8x2x32xf32, #tpu.memory_space<vmem>>, vector<1x2x32xf32>
    %171 = vector.shape_cast %170 : vector<1x2x32xf32> to vector<2x32xf32>
    %172 = vector.shape_cast %169 : vector<2x32xf32> to vector<1x2x32xf32>
    tpu.vector_store %arg12[%c4, %c0_41, %c0_42], %172 {strides = array<i32>} : memref<8x2x32xf32, #tpu.memory_space<vmem>>, vector<1x2x32xf32>,
    %173 = vector.extract_strided_slice %10 {offsets = [10, 0], sizes = [2, 128], strides = [1, 1]} : vector<16x128xf32> to vector<2x128xf32>
    %174 = arith.truncf %169 : vector<2x32xf32> to vector<2x32xbf16>
    %cst_43 = arith.constant dense<0.000000e+00> : vector<2x128xf32>
    %175 = tpu.matmul %174, %5, %cst_43 {dimension_numbers = #tpu.dot_dimension_numbers<[1], [0], [0], [1], [0, 0, 1, 1], [], []>} : vector<2x32xbf16>, vector<32x128xbf16>, vector<2x128xf32> -> vector<2x128xf32>
    %176 = arith.addf %173, %175 : vector<2x128xf32>
    %177 = vector.extract_strided_slice %176 {offsets = [0, 0], sizes = [2, 32], strides = [1, 1]} : vector<2x128xf32> to vector<2x32xf32>
    %178 = arith.negf %177 : vector<2x32xf32>
    %179 = math.exp %178 : vector<2x32xf32>
    %cst_44 = arith.constant 1.000000e+00 : f32
    %180 = vector.broadcast %cst_44 : f32 to vector<2x32xf32>
    %181 = arith.addf %180, %179 : vector<2x32xf32>
    %182 = arith.divf %180, %181 : vector<2x32xf32>
    %183 = vector.extract_strided_slice %176 {offsets = [0, 32], sizes = [2, 32], strides = [1, 1]} : vector<2x128xf32> to vector<2x32xf32>
    %184 = arith.negf %183 : vector<2x32xf32>
    %185 = math.exp %184 : vector<2x32xf32>
    %cst_45 = arith.constant 1.000000e+00 : f32
    %186 = vector.broadcast %cst_45 : f32 to vector<2x32xf32>
    %187 = arith.addf %186, %185 : vector<2x32xf32>
    %188 = arith.divf %186, %187 : vector<2x32xf32>
    %189 = vector.extract_strided_slice %176 {offsets = [0, 64], sizes = [2, 32], strides = [1, 1]} : vector<2x128xf32> to vector<2x32xf32>
    %190 = math.tanh %189 : vector<2x32xf32>
    %191 = vector.extract_strided_slice %176 {offsets = [0, 96], sizes = [2, 32], strides = [1, 1]} : vector<2x128xf32> to vector<2x32xf32>
    %192 = arith.negf %191 : vector<2x32xf32>
    %193 = math.exp %192 : vector<2x32xf32>
    %cst_46 = arith.constant 1.000000e+00 : f32
    %194 = vector.broadcast %cst_46 : f32 to vector<2x32xf32>
    %195 = arith.addf %194, %193 : vector<2x32xf32>
    %196 = arith.divf %194, %195 : vector<2x32xf32>
    %197 = arith.mulf %188, %167 : vector<2x32xf32>
    %198 = arith.mulf %182, %190 : vector<2x32xf32>
    %199 = arith.addf %197, %198 : vector<2x32xf32>
    %200 = math.tanh %199 : vector<2x32xf32>
    %201 = arith.mulf %196, %200 : vector<2x32xf32>
    %c5 = arith.constant 5 : index
    %c0_47 = arith.constant 0 : index
    %c0_48 = arith.constant 0 : index
    %202 = vector.load %arg12[%c5, %c0_47, %c0_48] : memref<8x2x32xf32, #tpu.memory_space<vmem>>, vector<1x2x32xf32>
    %203 = vector.shape_cast %202 : vector<1x2x32xf32> to vector<2x32xf32>
    %204 = vector.shape_cast %201 : vector<2x32xf32> to vector<1x2x32xf32>
    tpu.vector_store %arg12[%c5, %c0_47, %c0_48], %204 {strides = array<i32>} : memref<8x2x32xf32, #tpu.memory_space<vmem>>, vector<1x2x32xf32>,
    %205 = vector.extract_strided_slice %10 {offsets = [12, 0], sizes = [2, 128], strides = [1, 1]} : vector<16x128xf32> to vector<2x128xf32>
    %206 = arith.truncf %201 : vector<2x32xf32> to vector<2x32xbf16>
    %cst_49 = arith.constant dense<0.000000e+00> : vector<2x128xf32>
    %207 = tpu.matmul %206, %5, %cst_49 {dimension_numbers = #tpu.dot_dimension_numbers<[1], [0], [0], [1], [0, 0, 1, 1], [], []>} : vector<2x32xbf16>, vector<32x128xbf16>, vector<2x128xf32> -> vector<2x128xf32>
    %208 = arith.addf %205, %207 : vector<2x128xf32>
    %209 = vector.extract_strided_slice %208 {offsets = [0, 0], sizes = [2, 32], strides = [1, 1]} : vector<2x128xf32> to vector<2x32xf32>
    %210 = arith.negf %209 : vector<2x32xf32>
    %211 = math.exp %210 : vector<2x32xf32>
    %cst_50 = arith.constant 1.000000e+00 : f32
    %212 = vector.broadcast %cst_50 : f32 to vector<2x32xf32>
    %213 = arith.addf %212, %211 : vector<2x32xf32>
    %214 = arith.divf %212, %213 : vector<2x32xf32>
    %215 = vector.extract_strided_slice %208 {offsets = [0, 32], sizes = [2, 32], strides = [1, 1]} : vector<2x128xf32> to vector<2x32xf32>
    %216 = arith.negf %215 : vector<2x32xf32>
    %217 = math.exp %216 : vector<2x32xf32>
    %cst_51 = arith.constant 1.000000e+00 : f32
    %218 = vector.broadcast %cst_51 : f32 to vector<2x32xf32>
    %219 = arith.addf %218, %217 : vector<2x32xf32>
    %220 = arith.divf %218, %219 : vector<2x32xf32>
    %221 = vector.extract_strided_slice %208 {offsets = [0, 64], sizes = [2, 32], strides = [1, 1]} : vector<2x128xf32> to vector<2x32xf32>
    %222 = math.tanh %221 : vector<2x32xf32>
    %223 = vector.extract_strided_slice %208 {offsets = [0, 96], sizes = [2, 32], strides = [1, 1]} : vector<2x128xf32> to vector<2x32xf32>
    %224 = arith.negf %223 : vector<2x32xf32>
    %225 = math.exp %224 : vector<2x32xf32>
    %cst_52 = arith.constant 1.000000e+00 : f32
    %226 = vector.broadcast %cst_52 : f32 to vector<2x32xf32>
    %227 = arith.addf %226, %225 : vector<2x32xf32>
    %228 = arith.divf %226, %227 : vector<2x32xf32>
    %229 = arith.mulf %220, %199 : vector<2x32xf32>
    %230 = arith.mulf %214, %222 : vector<2x32xf32>
    %231 = arith.addf %229, %230 : vector<2x32xf32>
    %232 = math.tanh %231 : vector<2x32xf32>
    %233 = arith.mulf %228, %232 : vector<2x32xf32>
    %c6 = arith.constant 6 : index
    %c0_53 = arith.constant 0 : index
    %c0_54 = arith.constant 0 : index
    %234 = vector.load %arg12[%c6, %c0_53, %c0_54] : memref<8x2x32xf32, #tpu.memory_space<vmem>>, vector<1x2x32xf32>
    %235 = vector.shape_cast %234 : vector<1x2x32xf32> to vector<2x32xf32>
    %236 = vector.shape_cast %233 : vector<2x32xf32> to vector<1x2x32xf32>
    tpu.vector_store %arg12[%c6, %c0_53, %c0_54], %236 {strides = array<i32>} : memref<8x2x32xf32, #tpu.memory_space<vmem>>, vector<1x2x32xf32>,
    %237 = vector.extract_strided_slice %10 {offsets = [14, 0], sizes = [2, 128], strides = [1, 1]} : vector<16x128xf32> to vector<2x128xf32>
    %238 = arith.truncf %233 : vector<2x32xf32> to vector<2x32xbf16>
    %cst_55 = arith.constant dense<0.000000e+00> : vector<2x128xf32>
    %239 = tpu.matmul %238, %5, %cst_55 {dimension_numbers = #tpu.dot_dimension_numbers<[1], [0], [0], [1], [0, 0, 1, 1], [], []>} : vector<2x32xbf16>, vector<32x128xbf16>, vector<2x128xf32> -> vector<2x128xf32>
    %240 = arith.addf %237, %239 : vector<2x128xf32>
    %241 = vector.extract_strided_slice %240 {offsets = [0, 0], sizes = [2, 32], strides = [1, 1]} : vector<2x128xf32> to vector<2x32xf32>
    %242 = arith.negf %241 : vector<2x32xf32>
    %243 = math.exp %242 : vector<2x32xf32>
    %cst_56 = arith.constant 1.000000e+00 : f32
    %244 = vector.broadcast %cst_56 : f32 to vector<2x32xf32>
    %245 = arith.addf %244, %243 : vector<2x32xf32>
    %246 = arith.divf %244, %245 : vector<2x32xf32>
    %247 = vector.extract_strided_slice %240 {offsets = [0, 32], sizes = [2, 32], strides = [1, 1]} : vector<2x128xf32> to vector<2x32xf32>
    %248 = arith.negf %247 : vector<2x32xf32>
    %249 = math.exp %248 : vector<2x32xf32>
    %cst_57 = arith.constant 1.000000e+00 : f32
    %250 = vector.broadcast %cst_57 : f32 to vector<2x32xf32>
    %251 = arith.addf %250, %249 : vector<2x32xf32>
    %252 = arith.divf %250, %251 : vector<2x32xf32>
    %253 = vector.extract_strided_slice %240 {offsets = [0, 64], sizes = [2, 32], strides = [1, 1]} : vector<2x128xf32> to vector<2x32xf32>
    %254 = math.tanh %253 : vector<2x32xf32>
    %255 = vector.extract_strided_slice %240 {offsets = [0, 96], sizes = [2, 32], strides = [1, 1]} : vector<2x128xf32> to vector<2x32xf32>
    %256 = arith.negf %255 : vector<2x32xf32>
    %257 = math.exp %256 : vector<2x32xf32>
    %cst_58 = arith.constant 1.000000e+00 : f32
    %258 = vector.broadcast %cst_58 : f32 to vector<2x32xf32>
    %259 = arith.addf %258, %257 : vector<2x32xf32>
    %260 = arith.divf %258, %259 : vector<2x32xf32>
    %261 = arith.mulf %252, %231 : vector<2x32xf32>
    %262 = arith.mulf %246, %254 : vector<2x32xf32>
    %263 = arith.addf %261, %262 : vector<2x32xf32>
    %264 = math.tanh %263 : vector<2x32xf32>
    %265 = arith.mulf %260, %264 : vector<2x32xf32>
    %c7 = arith.constant 7 : index
    %c0_59 = arith.constant 0 : index
    %c0_60 = arith.constant 0 : index
    %266 = vector.load %arg12[%c7, %c0_59, %c0_60] : memref<8x2x32xf32, #tpu.memory_space<vmem>>, vector<1x2x32xf32>
    %267 = vector.shape_cast %266 : vector<1x2x32xf32> to vector<2x32xf32>
    %268 = vector.shape_cast %265 : vector<2x32xf32> to vector<1x2x32xf32>
    tpu.vector_store %arg12[%c7, %c0_59, %c0_60], %268 {strides = array<i32>} : memref<8x2x32xf32, #tpu.memory_space<vmem>>, vector<1x2x32xf32>,
    %c0_61 = arith.constant 0 : index
    %c0_62 = arith.constant 0 : index
    %269 = vector.load %arg10[%c0_61, %c0_62] : memref<2x32xf32, #tpu.memory_space<vmem>>, vector<2x32xf32>
    tpu.vector_store %arg10[%c0_61, %c0_62], %265 {strides = array<i32>} : memref<2x32xf32, #tpu.memory_space<vmem>>, vector<2x32xf32>,
    %c0_63 = arith.constant 0 : index
    %c0_64 = arith.constant 0 : index
    %270 = vector.load %arg11[%c0_63, %c0_64] : memref<2x32xf32, #tpu.memory_space<vmem>>, vector<2x32xf32>
    tpu.vector_store %arg11[%c0_63, %c0_64], %263 {strides = array<i32>} : memref<2x32xf32, #tpu.memory_space<vmem>>, vector<2x32xf32>,
    %c0_65 = arith.constant 0 : index
    %c0_66 = arith.constant 0 : index
    %271 = vector.load %arg5[%c0_65, %c0_66] : memref<1x32xf32, #tpu.memory_space<vmem>>, vector<1x32xf32>
    %c0_67 = arith.constant 0 : index
    %c0_68 = arith.constant 0 : index
    %272 = vector.load %arg6[%c0_67, %c0_68] : memref<1x32xf32, #tpu.memory_space<vmem>>, vector<1x32xf32>
    %c0_69 = arith.constant 0 : index
    %c0_70 = arith.constant 0 : index
    %273 = vector.load %arg7[%c0_69, %c0_70] : memref<1x32xf32, #tpu.memory_space<vmem>>, vector<1x32xf32>
    %c0_71 = arith.constant 0 : index
    %c0_72 = arith.constant 0 : index
    %274 = vector.load %arg8[%c0_71, %c0_72] : memref<1x32xf32, #tpu.memory_space<vmem>>, vector<1x32xf32>
    %c0_73 = arith.constant 0 : index
    %c0_74 = arith.constant 0 : index
    %c0_75 = arith.constant 0 : index
    %275 = vector.load %arg12[%c0_73, %c0_74, %c0_75] : memref<8x2x32xf32, #tpu.memory_space<vmem>>, vector<1x2x32xf32>
    %276 = vector.shape_cast %275 : vector<1x2x32xf32> to vector<2x32xf32>
    %cst_76 = arith.constant dense<0.000000e+00> : vector<2xf32>
    %277 = vector.multi_reduction <add>, %276, %cst_76 [1] : vector<2x32xf32> to vector<2xf32>
    %278 = vector.shape_cast %277 : vector<2xf32> to vector<2x1xf32>
    %cst_77 = arith.constant 3.200000e+01 : f32
    %279 = vector.broadcast %cst_77 : f32 to vector<2x1xf32>
    %280 = arith.divf %278, %279 : vector<2x1xf32>
    %281 = vector.broadcast %280 : vector<2x1xf32> to vector<2x32xf32>
    %282 = arith.subf %276, %281 : vector<2x32xf32>
    %283 = arith.mulf %282, %282 : vector<2x32xf32>
    %cst_78 = arith.constant dense<0.000000e+00> : vector<2xf32>
    %284 = vector.multi_reduction <add>, %283, %cst_78 [1] : vector<2x32xf32> to vector<2xf32>
    %285 = vector.shape_cast %284 : vector<2xf32> to vector<2x1xf32>
    %cst_79 = arith.constant 3.200000e+01 : f32
    %286 = vector.broadcast %cst_79 : f32 to vector<2x1xf32>
    %287 = arith.divf %285, %286 : vector<2x1xf32>
    %288 = vector.broadcast %280 : vector<2x1xf32> to vector<2x32xf32>
    %289 = arith.subf %276, %288 : vector<2x32xf32>
    %cst_80 = arith.constant 9.99999974E-6 : f32
    %290 = vector.broadcast %cst_80 : f32 to vector<2x1xf32>
    %291 = arith.addf %287, %290 : vector<2x1xf32>
    %292 = math.rsqrt %291 : vector<2x1xf32>
    %293 = vector.broadcast %292 : vector<2x1xf32> to vector<2x32xf32>
    %294 = arith.mulf %289, %293 : vector<2x32xf32>
    %295 = vector.broadcast %271 : vector<1x32xf32> to vector<2x32xf32>
    %296 = arith.mulf %294, %295 : vector<2x32xf32>
    %297 = vector.broadcast %272 : vector<1x32xf32> to vector<2x32xf32>
    %298 = arith.addf %296, %297 : vector<2x32xf32>
    %299 = vector.extract_strided_slice %3 {offsets = [0, 0], sizes = [2, 32], strides = [1, 1]} : vector<16x32xf32> to vector<2x32xf32>
    %300 = arith.addf %298, %299 : vector<2x32xf32>
    %cst_81 = arith.constant dense<0.000000e+00> : vector<2xf32>
    %301 = vector.multi_reduction <add>, %300, %cst_81 [1] : vector<2x32xf32> to vector<2xf32>
    %302 = vector.shape_cast %301 : vector<2xf32> to vector<2x1xf32>
    %cst_82 = arith.constant 3.200000e+01 : f32
    %303 = vector.broadcast %cst_82 : f32 to vector<2x1xf32>
    %304 = arith.divf %302, %303 : vector<2x1xf32>
    %305 = vector.broadcast %304 : vector<2x1xf32> to vector<2x32xf32>
    %306 = arith.subf %300, %305 : vector<2x32xf32>
    %307 = arith.mulf %306, %306 : vector<2x32xf32>
    %cst_83 = arith.constant dense<0.000000e+00> : vector<2xf32>
    %308 = vector.multi_reduction <add>, %307, %cst_83 [1] : vector<2x32xf32> to vector<2xf32>
    %309 = vector.shape_cast %308 : vector<2xf32> to vector<2x1xf32>
    %cst_84 = arith.constant 3.200000e+01 : f32
    %310 = vector.broadcast %cst_84 : f32 to vector<2x1xf32>
    %311 = arith.divf %309, %310 : vector<2x1xf32>
    %312 = vector.broadcast %304 : vector<2x1xf32> to vector<2x32xf32>
    %313 = arith.subf %300, %312 : vector<2x32xf32>
    %cst_85 = arith.constant 9.99999974E-6 : f32
    %314 = vector.broadcast %cst_85 : f32 to vector<2x1xf32>
    %315 = arith.addf %311, %314 : vector<2x1xf32>
    %316 = math.rsqrt %315 : vector<2x1xf32>
    %317 = vector.broadcast %316 : vector<2x1xf32> to vector<2x32xf32>
    %318 = arith.mulf %313, %317 : vector<2x32xf32>
    %319 = vector.broadcast %273 : vector<1x32xf32> to vector<2x32xf32>
    %320 = arith.mulf %318, %319 : vector<2x32xf32>
    %321 = vector.broadcast %274 : vector<1x32xf32> to vector<2x32xf32>
    %322 = arith.addf %320, %321 : vector<2x32xf32>
    %c0_86 = arith.constant 0 : index
    %c0_87 = arith.constant 0 : index
    %c0_88 = arith.constant 0 : index
    %323 = vector.load %arg9[%c0_86, %c0_87, %c0_88] : memref<2x8x32xf32, #tpu.memory_space<vmem>>, vector<2x1x32xf32>
    %324 = vector.shape_cast %323 : vector<2x1x32xf32> to vector<2x32xf32>
    %325 = vector.shape_cast %322 : vector<2x32xf32> to vector<2x1x32xf32>
    tpu.vector_store %arg9[%c0_86, %c0_87, %c0_88], %325 {strides = array<i32>} : memref<2x8x32xf32, #tpu.memory_space<vmem>>, vector<2x1x32xf32>,
    %c1_89 = arith.constant 1 : index
    %c0_90 = arith.constant 0 : index
    %c0_91 = arith.constant 0 : index
    %326 = vector.load %arg12[%c1_89, %c0_90, %c0_91] : memref<8x2x32xf32, #tpu.memory_space<vmem>>, vector<1x2x32xf32>
    %327 = vector.shape_cast %326 : vector<1x2x32xf32> to vector<2x32xf32>
    %cst_92 = arith.constant dense<0.000000e+00> : vector<2xf32>
    %328 = vector.multi_reduction <add>, %327, %cst_92 [1] : vector<2x32xf32> to vector<2xf32>
    %329 = vector.shape_cast %328 : vector<2xf32> to vector<2x1xf32>
    %cst_93 = arith.constant 3.200000e+01 : f32
    %330 = vector.broadcast %cst_93 : f32 to vector<2x1xf32>
    %331 = arith.divf %329, %330 : vector<2x1xf32>
    %332 = vector.broadcast %331 : vector<2x1xf32> to vector<2x32xf32>
    %333 = arith.subf %327, %332 : vector<2x32xf32>
    %334 = arith.mulf %333, %333 : vector<2x32xf32>
    %cst_94 = arith.constant dense<0.000000e+00> : vector<2xf32>
    %335 = vector.multi_reduction <add>, %334, %cst_94 [1] : vector<2x32xf32> to vector<2xf32>
    %336 = vector.shape_cast %335 : vector<2xf32> to vector<2x1xf32>
    %cst_95 = arith.constant 3.200000e+01 : f32
    %337 = vector.broadcast %cst_95 : f32 to vector<2x1xf32>
    %338 = arith.divf %336, %337 : vector<2x1xf32>
    %339 = vector.broadcast %331 : vector<2x1xf32> to vector<2x32xf32>
    %340 = arith.subf %327, %339 : vector<2x32xf32>
    %cst_96 = arith.constant 9.99999974E-6 : f32
    %341 = vector.broadcast %cst_96 : f32 to vector<2x1xf32>
    %342 = arith.addf %338, %341 : vector<2x1xf32>
    %343 = math.rsqrt %342 : vector<2x1xf32>
    %344 = vector.broadcast %343 : vector<2x1xf32> to vector<2x32xf32>
    %345 = arith.mulf %340, %344 : vector<2x32xf32>
    %346 = vector.broadcast %271 : vector<1x32xf32> to vector<2x32xf32>
    %347 = arith.mulf %345, %346 : vector<2x32xf32>
    %348 = vector.broadcast %272 : vector<1x32xf32> to vector<2x32xf32>
    %349 = arith.addf %347, %348 : vector<2x32xf32>
    %350 = vector.extract_strided_slice %3 {offsets = [2, 0], sizes = [2, 32], strides = [1, 1]} : vector<16x32xf32> to vector<2x32xf32>
    %351 = arith.addf %349, %350 : vector<2x32xf32>
    %cst_97 = arith.constant dense<0.000000e+00> : vector<2xf32>
    %352 = vector.multi_reduction <add>, %351, %cst_97 [1] : vector<2x32xf32> to vector<2xf32>
    %353 = vector.shape_cast %352 : vector<2xf32> to vector<2x1xf32>
    %cst_98 = arith.constant 3.200000e+01 : f32
    %354 = vector.broadcast %cst_98 : f32 to vector<2x1xf32>
    %355 = arith.divf %353, %354 : vector<2x1xf32>
    %356 = vector.broadcast %355 : vector<2x1xf32> to vector<2x32xf32>
    %357 = arith.subf %351, %356 : vector<2x32xf32>
    %358 = arith.mulf %357, %357 : vector<2x32xf32>
    %cst_99 = arith.constant dense<0.000000e+00> : vector<2xf32>
    %359 = vector.multi_reduction <add>, %358, %cst_99 [1] : vector<2x32xf32> to vector<2xf32>
    %360 = vector.shape_cast %359 : vector<2xf32> to vector<2x1xf32>
    %cst_100 = arith.constant 3.200000e+01 : f32
    %361 = vector.broadcast %cst_100 : f32 to vector<2x1xf32>
    %362 = arith.divf %360, %361 : vector<2x1xf32>
    %363 = vector.broadcast %355 : vector<2x1xf32> to vector<2x32xf32>
    %364 = arith.subf %351, %363 : vector<2x32xf32>
    %cst_101 = arith.constant 9.99999974E-6 : f32
    %365 = vector.broadcast %cst_101 : f32 to vector<2x1xf32>
    %366 = arith.addf %362, %365 : vector<2x1xf32>
    %367 = math.rsqrt %366 : vector<2x1xf32>
    %368 = vector.broadcast %367 : vector<2x1xf32> to vector<2x32xf32>
    %369 = arith.mulf %364, %368 : vector<2x32xf32>
    %370 = vector.broadcast %273 : vector<1x32xf32> to vector<2x32xf32>
    %371 = arith.mulf %369, %370 : vector<2x32xf32>
    %372 = vector.broadcast %274 : vector<1x32xf32> to vector<2x32xf32>
    %373 = arith.addf %371, %372 : vector<2x32xf32>
    %c0_102 = arith.constant 0 : index
    %c1_103 = arith.constant 1 : index
    %c0_104 = arith.constant 0 : index
    %374 = vector.load %arg9[%c0_102, %c1_103, %c0_104] : memref<2x8x32xf32, #tpu.memory_space<vmem>>, vector<2x1x32xf32>
    %375 = vector.shape_cast %374 : vector<2x1x32xf32> to vector<2x32xf32>
    %376 = vector.shape_cast %373 : vector<2x32xf32> to vector<2x1x32xf32>
    tpu.vector_store %arg9[%c0_102, %c1_103, %c0_104], %376 {strides = array<i32>} : memref<2x8x32xf32, #tpu.memory_space<vmem>>, vector<2x1x32xf32>,
    %c2_105 = arith.constant 2 : index
    %c0_106 = arith.constant 0 : index
    %c0_107 = arith.constant 0 : index
    %377 = vector.load %arg12[%c2_105, %c0_106, %c0_107] : memref<8x2x32xf32, #tpu.memory_space<vmem>>, vector<1x2x32xf32>
    %378 = vector.shape_cast %377 : vector<1x2x32xf32> to vector<2x32xf32>
    %cst_108 = arith.constant dense<0.000000e+00> : vector<2xf32>
    %379 = vector.multi_reduction <add>, %378, %cst_108 [1] : vector<2x32xf32> to vector<2xf32>
    %380 = vector.shape_cast %379 : vector<2xf32> to vector<2x1xf32>
    %cst_109 = arith.constant 3.200000e+01 : f32
    %381 = vector.broadcast %cst_109 : f32 to vector<2x1xf32>
    %382 = arith.divf %380, %381 : vector<2x1xf32>
    %383 = vector.broadcast %382 : vector<2x1xf32> to vector<2x32xf32>
    %384 = arith.subf %378, %383 : vector<2x32xf32>
    %385 = arith.mulf %384, %384 : vector<2x32xf32>
    %cst_110 = arith.constant dense<0.000000e+00> : vector<2xf32>
    %386 = vector.multi_reduction <add>, %385, %cst_110 [1] : vector<2x32xf32> to vector<2xf32>
    %387 = vector.shape_cast %386 : vector<2xf32> to vector<2x1xf32>
    %cst_111 = arith.constant 3.200000e+01 : f32
    %388 = vector.broadcast %cst_111 : f32 to vector<2x1xf32>
    %389 = arith.divf %387, %388 : vector<2x1xf32>
    %390 = vector.broadcast %382 : vector<2x1xf32> to vector<2x32xf32>
    %391 = arith.subf %378, %390 : vector<2x32xf32>
    %cst_112 = arith.constant 9.99999974E-6 : f32
    %392 = vector.broadcast %cst_112 : f32 to vector<2x1xf32>
    %393 = arith.addf %389, %392 : vector<2x1xf32>
    %394 = math.rsqrt %393 : vector<2x1xf32>
    %395 = vector.broadcast %394 : vector<2x1xf32> to vector<2x32xf32>
    %396 = arith.mulf %391, %395 : vector<2x32xf32>
    %397 = vector.broadcast %271 : vector<1x32xf32> to vector<2x32xf32>
    %398 = arith.mulf %396, %397 : vector<2x32xf32>
    %399 = vector.broadcast %272 : vector<1x32xf32> to vector<2x32xf32>
    %400 = arith.addf %398, %399 : vector<2x32xf32>
    %401 = vector.extract_strided_slice %3 {offsets = [4, 0], sizes = [2, 32], strides = [1, 1]} : vector<16x32xf32> to vector<2x32xf32>
    %402 = arith.addf %400, %401 : vector<2x32xf32>
    %cst_113 = arith.constant dense<0.000000e+00> : vector<2xf32>
    %403 = vector.multi_reduction <add>, %402, %cst_113 [1] : vector<2x32xf32> to vector<2xf32>
    %404 = vector.shape_cast %403 : vector<2xf32> to vector<2x1xf32>
    %cst_114 = arith.constant 3.200000e+01 : f32
    %405 = vector.broadcast %cst_114 : f32 to vector<2x1xf32>
    %406 = arith.divf %404, %405 : vector<2x1xf32>
    %407 = vector.broadcast %406 : vector<2x1xf32> to vector<2x32xf32>
    %408 = arith.subf %402, %407 : vector<2x32xf32>
    %409 = arith.mulf %408, %408 : vector<2x32xf32>
    %cst_115 = arith.constant dense<0.000000e+00> : vector<2xf32>
    %410 = vector.multi_reduction <add>, %409, %cst_115 [1] : vector<2x32xf32> to vector<2xf32>
    %411 = vector.shape_cast %410 : vector<2xf32> to vector<2x1xf32>
    %cst_116 = arith.constant 3.200000e+01 : f32
    %412 = vector.broadcast %cst_116 : f32 to vector<2x1xf32>
    %413 = arith.divf %411, %412 : vector<2x1xf32>
    %414 = vector.broadcast %406 : vector<2x1xf32> to vector<2x32xf32>
    %415 = arith.subf %402, %414 : vector<2x32xf32>
    %cst_117 = arith.constant 9.99999974E-6 : f32
    %416 = vector.broadcast %cst_117 : f32 to vector<2x1xf32>
    %417 = arith.addf %413, %416 : vector<2x1xf32>
    %418 = math.rsqrt %417 : vector<2x1xf32>
    %419 = vector.broadcast %418 : vector<2x1xf32> to vector<2x32xf32>
    %420 = arith.mulf %415, %419 : vector<2x32xf32>
    %421 = vector.broadcast %273 : vector<1x32xf32> to vector<2x32xf32>
    %422 = arith.mulf %420, %421 : vector<2x32xf32>
    %423 = vector.broadcast %274 : vector<1x32xf32> to vector<2x32xf32>
    %424 = arith.addf %422, %423 : vector<2x32xf32>
    %c0_118 = arith.constant 0 : index
    %c2_119 = arith.constant 2 : index
    %c0_120 = arith.constant 0 : index
    %425 = vector.load %arg9[%c0_118, %c2_119, %c0_120] : memref<2x8x32xf32, #tpu.memory_space<vmem>>, vector<2x1x32xf32>
    %426 = vector.shape_cast %425 : vector<2x1x32xf32> to vector<2x32xf32>
    %427 = vector.shape_cast %424 : vector<2x32xf32> to vector<2x1x32xf32>
    tpu.vector_store %arg9[%c0_118, %c2_119, %c0_120], %427 {strides = array<i32>} : memref<2x8x32xf32, #tpu.memory_space<vmem>>, vector<2x1x32xf32>,
    %c3_121 = arith.constant 3 : index
    %c0_122 = arith.constant 0 : index
    %c0_123 = arith.constant 0 : index
    %428 = vector.load %arg12[%c3_121, %c0_122, %c0_123] : memref<8x2x32xf32, #tpu.memory_space<vmem>>, vector<1x2x32xf32>
    %429 = vector.shape_cast %428 : vector<1x2x32xf32> to vector<2x32xf32>
    %cst_124 = arith.constant dense<0.000000e+00> : vector<2xf32>
    %430 = vector.multi_reduction <add>, %429, %cst_124 [1] : vector<2x32xf32> to vector<2xf32>
    %431 = vector.shape_cast %430 : vector<2xf32> to vector<2x1xf32>
    %cst_125 = arith.constant 3.200000e+01 : f32
    %432 = vector.broadcast %cst_125 : f32 to vector<2x1xf32>
    %433 = arith.divf %431, %432 : vector<2x1xf32>
    %434 = vector.broadcast %433 : vector<2x1xf32> to vector<2x32xf32>
    %435 = arith.subf %429, %434 : vector<2x32xf32>
    %436 = arith.mulf %435, %435 : vector<2x32xf32>
    %cst_126 = arith.constant dense<0.000000e+00> : vector<2xf32>
    %437 = vector.multi_reduction <add>, %436, %cst_126 [1] : vector<2x32xf32> to vector<2xf32>
    %438 = vector.shape_cast %437 : vector<2xf32> to vector<2x1xf32>
    %cst_127 = arith.constant 3.200000e+01 : f32
    %439 = vector.broadcast %cst_127 : f32 to vector<2x1xf32>
    %440 = arith.divf %438, %439 : vector<2x1xf32>
    %441 = vector.broadcast %433 : vector<2x1xf32> to vector<2x32xf32>
    %442 = arith.subf %429, %441 : vector<2x32xf32>
    %cst_128 = arith.constant 9.99999974E-6 : f32
    %443 = vector.broadcast %cst_128 : f32 to vector<2x1xf32>
    %444 = arith.addf %440, %443 : vector<2x1xf32>
    %445 = math.rsqrt %444 : vector<2x1xf32>
    %446 = vector.broadcast %445 : vector<2x1xf32> to vector<2x32xf32>
    %447 = arith.mulf %442, %446 : vector<2x32xf32>
    %448 = vector.broadcast %271 : vector<1x32xf32> to vector<2x32xf32>
    %449 = arith.mulf %447, %448 : vector<2x32xf32>
    %450 = vector.broadcast %272 : vector<1x32xf32> to vector<2x32xf32>
    %451 = arith.addf %449, %450 : vector<2x32xf32>
    %452 = vector.extract_strided_slice %3 {offsets = [6, 0], sizes = [2, 32], strides = [1, 1]} : vector<16x32xf32> to vector<2x32xf32>
    %453 = arith.addf %451, %452 : vector<2x32xf32>
    %cst_129 = arith.constant dense<0.000000e+00> : vector<2xf32>
    %454 = vector.multi_reduction <add>, %453, %cst_129 [1] : vector<2x32xf32> to vector<2xf32>
    %455 = vector.shape_cast %454 : vector<2xf32> to vector<2x1xf32>
    %cst_130 = arith.constant 3.200000e+01 : f32
    %456 = vector.broadcast %cst_130 : f32 to vector<2x1xf32>
    %457 = arith.divf %455, %456 : vector<2x1xf32>
    %458 = vector.broadcast %457 : vector<2x1xf32> to vector<2x32xf32>
    %459 = arith.subf %453, %458 : vector<2x32xf32>
    %460 = arith.mulf %459, %459 : vector<2x32xf32>
    %cst_131 = arith.constant dense<0.000000e+00> : vector<2xf32>
    %461 = vector.multi_reduction <add>, %460, %cst_131 [1] : vector<2x32xf32> to vector<2xf32>
    %462 = vector.shape_cast %461 : vector<2xf32> to vector<2x1xf32>
    %cst_132 = arith.constant 3.200000e+01 : f32
    %463 = vector.broadcast %cst_132 : f32 to vector<2x1xf32>
    %464 = arith.divf %462, %463 : vector<2x1xf32>
    %465 = vector.broadcast %457 : vector<2x1xf32> to vector<2x32xf32>
    %466 = arith.subf %453, %465 : vector<2x32xf32>
    %cst_133 = arith.constant 9.99999974E-6 : f32
    %467 = vector.broadcast %cst_133 : f32 to vector<2x1xf32>
    %468 = arith.addf %464, %467 : vector<2x1xf32>
    %469 = math.rsqrt %468 : vector<2x1xf32>
    %470 = vector.broadcast %469 : vector<2x1xf32> to vector<2x32xf32>
    %471 = arith.mulf %466, %470 : vector<2x32xf32>
    %472 = vector.broadcast %273 : vector<1x32xf32> to vector<2x32xf32>
    %473 = arith.mulf %471, %472 : vector<2x32xf32>
    %474 = vector.broadcast %274 : vector<1x32xf32> to vector<2x32xf32>
    %475 = arith.addf %473, %474 : vector<2x32xf32>
    %c0_134 = arith.constant 0 : index
    %c3_135 = arith.constant 3 : index
    %c0_136 = arith.constant 0 : index
    %476 = vector.load %arg9[%c0_134, %c3_135, %c0_136] : memref<2x8x32xf32, #tpu.memory_space<vmem>>, vector<2x1x32xf32>
    %477 = vector.shape_cast %476 : vector<2x1x32xf32> to vector<2x32xf32>
    %478 = vector.shape_cast %475 : vector<2x32xf32> to vector<2x1x32xf32>
    tpu.vector_store %arg9[%c0_134, %c3_135, %c0_136], %478 {strides = array<i32>} : memref<2x8x32xf32, #tpu.memory_space<vmem>>, vector<2x1x32xf32>,
    %c4_137 = arith.constant 4 : index
    %c0_138 = arith.constant 0 : index
    %c0_139 = arith.constant 0 : index
    %479 = vector.load %arg12[%c4_137, %c0_138, %c0_139] : memref<8x2x32xf32, #tpu.memory_space<vmem>>, vector<1x2x32xf32>
    %480 = vector.shape_cast %479 : vector<1x2x32xf32> to vector<2x32xf32>
    %cst_140 = arith.constant dense<0.000000e+00> : vector<2xf32>
    %481 = vector.multi_reduction <add>, %480, %cst_140 [1] : vector<2x32xf32> to vector<2xf32>
    %482 = vector.shape_cast %481 : vector<2xf32> to vector<2x1xf32>
    %cst_141 = arith.constant 3.200000e+01 : f32
    %483 = vector.broadcast %cst_141 : f32 to vector<2x1xf32>
    %484 = arith.divf %482, %483 : vector<2x1xf32>
    %485 = vector.broadcast %484 : vector<2x1xf32> to vector<2x32xf32>
    %486 = arith.subf %480, %485 : vector<2x32xf32>
    %487 = arith.mulf %486, %486 : vector<2x32xf32>
    %cst_142 = arith.constant dense<0.000000e+00> : vector<2xf32>
    %488 = vector.multi_reduction <add>, %487, %cst_142 [1] : vector<2x32xf32> to vector<2xf32>
    %489 = vector.shape_cast %488 : vector<2xf32> to vector<2x1xf32>
    %cst_143 = arith.constant 3.200000e+01 : f32
    %490 = vector.broadcast %cst_143 : f32 to vector<2x1xf32>
    %491 = arith.divf %489, %490 : vector<2x1xf32>
    %492 = vector.broadcast %484 : vector<2x1xf32> to vector<2x32xf32>
    %493 = arith.subf %480, %492 : vector<2x32xf32>
    %cst_144 = arith.constant 9.99999974E-6 : f32
    %494 = vector.broadcast %cst_144 : f32 to vector<2x1xf32>
    %495 = arith.addf %491, %494 : vector<2x1xf32>
    %496 = math.rsqrt %495 : vector<2x1xf32>
    %497 = vector.broadcast %496 : vector<2x1xf32> to vector<2x32xf32>
    %498 = arith.mulf %493, %497 : vector<2x32xf32>
    %499 = vector.broadcast %271 : vector<1x32xf32> to vector<2x32xf32>
    %500 = arith.mulf %498, %499 : vector<2x32xf32>
    %501 = vector.broadcast %272 : vector<1x32xf32> to vector<2x32xf32>
    %502 = arith.addf %500, %501 : vector<2x32xf32>
    %503 = vector.extract_strided_slice %3 {offsets = [8, 0], sizes = [2, 32], strides = [1, 1]} : vector<16x32xf32> to vector<2x32xf32>
    %504 = arith.addf %502, %503 : vector<2x32xf32>
    %cst_145 = arith.constant dense<0.000000e+00> : vector<2xf32>
    %505 = vector.multi_reduction <add>, %504, %cst_145 [1] : vector<2x32xf32> to vector<2xf32>
    %506 = vector.shape_cast %505 : vector<2xf32> to vector<2x1xf32>
    %cst_146 = arith.constant 3.200000e+01 : f32
    %507 = vector.broadcast %cst_146 : f32 to vector<2x1xf32>
    %508 = arith.divf %506, %507 : vector<2x1xf32>
    %509 = vector.broadcast %508 : vector<2x1xf32> to vector<2x32xf32>
    %510 = arith.subf %504, %509 : vector<2x32xf32>
    %511 = arith.mulf %510, %510 : vector<2x32xf32>
    %cst_147 = arith.constant dense<0.000000e+00> : vector<2xf32>
    %512 = vector.multi_reduction <add>, %511, %cst_147 [1] : vector<2x32xf32> to vector<2xf32>
    %513 = vector.shape_cast %512 : vector<2xf32> to vector<2x1xf32>
    %cst_148 = arith.constant 3.200000e+01 : f32
    %514 = vector.broadcast %cst_148 : f32 to vector<2x1xf32>
    %515 = arith.divf %513, %514 : vector<2x1xf32>
    %516 = vector.broadcast %508 : vector<2x1xf32> to vector<2x32xf32>
    %517 = arith.subf %504, %516 : vector<2x32xf32>
    %cst_149 = arith.constant 9.99999974E-6 : f32
    %518 = vector.broadcast %cst_149 : f32 to vector<2x1xf32>
    %519 = arith.addf %515, %518 : vector<2x1xf32>
    %520 = math.rsqrt %519 : vector<2x1xf32>
    %521 = vector.broadcast %520 : vector<2x1xf32> to vector<2x32xf32>
    %522 = arith.mulf %517, %521 : vector<2x32xf32>
    %523 = vector.broadcast %273 : vector<1x32xf32> to vector<2x32xf32>
    %524 = arith.mulf %522, %523 : vector<2x32xf32>
    %525 = vector.broadcast %274 : vector<1x32xf32> to vector<2x32xf32>
    %526 = arith.addf %524, %525 : vector<2x32xf32>
    %c0_150 = arith.constant 0 : index
    %c4_151 = arith.constant 4 : index
    %c0_152 = arith.constant 0 : index
    %527 = vector.load %arg9[%c0_150, %c4_151, %c0_152] : memref<2x8x32xf32, #tpu.memory_space<vmem>>, vector<2x1x32xf32>
    %528 = vector.shape_cast %527 : vector<2x1x32xf32> to vector<2x32xf32>
    %529 = vector.shape_cast %526 : vector<2x32xf32> to vector<2x1x32xf32>
    tpu.vector_store %arg9[%c0_150, %c4_151, %c0_152], %529 {strides = array<i32>} : memref<2x8x32xf32, #tpu.memory_space<vmem>>, vector<2x1x32xf32>,
    %c5_153 = arith.constant 5 : index
    %c0_154 = arith.constant 0 : index
    %c0_155 = arith.constant 0 : index
    %530 = vector.load %arg12[%c5_153, %c0_154, %c0_155] : memref<8x2x32xf32, #tpu.memory_space<vmem>>, vector<1x2x32xf32>
    %531 = vector.shape_cast %530 : vector<1x2x32xf32> to vector<2x32xf32>
    %cst_156 = arith.constant dense<0.000000e+00> : vector<2xf32>
    %532 = vector.multi_reduction <add>, %531, %cst_156 [1] : vector<2x32xf32> to vector<2xf32>
    %533 = vector.shape_cast %532 : vector<2xf32> to vector<2x1xf32>
    %cst_157 = arith.constant 3.200000e+01 : f32
    %534 = vector.broadcast %cst_157 : f32 to vector<2x1xf32>
    %535 = arith.divf %533, %534 : vector<2x1xf32>
    %536 = vector.broadcast %535 : vector<2x1xf32> to vector<2x32xf32>
    %537 = arith.subf %531, %536 : vector<2x32xf32>
    %538 = arith.mulf %537, %537 : vector<2x32xf32>
    %cst_158 = arith.constant dense<0.000000e+00> : vector<2xf32>
    %539 = vector.multi_reduction <add>, %538, %cst_158 [1] : vector<2x32xf32> to vector<2xf32>
    %540 = vector.shape_cast %539 : vector<2xf32> to vector<2x1xf32>
    %cst_159 = arith.constant 3.200000e+01 : f32
    %541 = vector.broadcast %cst_159 : f32 to vector<2x1xf32>
    %542 = arith.divf %540, %541 : vector<2x1xf32>
    %543 = vector.broadcast %535 : vector<2x1xf32> to vector<2x32xf32>
    %544 = arith.subf %531, %543 : vector<2x32xf32>
    %cst_160 = arith.constant 9.99999974E-6 : f32
    %545 = vector.broadcast %cst_160 : f32 to vector<2x1xf32>
    %546 = arith.addf %542, %545 : vector<2x1xf32>
    %547 = math.rsqrt %546 : vector<2x1xf32>
    %548 = vector.broadcast %547 : vector<2x1xf32> to vector<2x32xf32>
    %549 = arith.mulf %544, %548 : vector<2x32xf32>
    %550 = vector.broadcast %271 : vector<1x32xf32> to vector<2x32xf32>
    %551 = arith.mulf %549, %550 : vector<2x32xf32>
    %552 = vector.broadcast %272 : vector<1x32xf32> to vector<2x32xf32>
    %553 = arith.addf %551, %552 : vector<2x32xf32>
    %554 = vector.extract_strided_slice %3 {offsets = [10, 0], sizes = [2, 32], strides = [1, 1]} : vector<16x32xf32> to vector<2x32xf32>
    %555 = arith.addf %553, %554 : vector<2x32xf32>
    %cst_161 = arith.constant dense<0.000000e+00> : vector<2xf32>
    %556 = vector.multi_reduction <add>, %555, %cst_161 [1] : vector<2x32xf32> to vector<2xf32>
    %557 = vector.shape_cast %556 : vector<2xf32> to vector<2x1xf32>
    %cst_162 = arith.constant 3.200000e+01 : f32
    %558 = vector.broadcast %cst_162 : f32 to vector<2x1xf32>
    %559 = arith.divf %557, %558 : vector<2x1xf32>
    %560 = vector.broadcast %559 : vector<2x1xf32> to vector<2x32xf32>
    %561 = arith.subf %555, %560 : vector<2x32xf32>
    %562 = arith.mulf %561, %561 : vector<2x32xf32>
    %cst_163 = arith.constant dense<0.000000e+00> : vector<2xf32>
    %563 = vector.multi_reduction <add>, %562, %cst_163 [1] : vector<2x32xf32> to vector<2xf32>
    %564 = vector.shape_cast %563 : vector<2xf32> to vector<2x1xf32>
    %cst_164 = arith.constant 3.200000e+01 : f32
    %565 = vector.broadcast %cst_164 : f32 to vector<2x1xf32>
    %566 = arith.divf %564, %565 : vector<2x1xf32>
    %567 = vector.broadcast %559 : vector<2x1xf32> to vector<2x32xf32>
    %568 = arith.subf %555, %567 : vector<2x32xf32>
    %cst_165 = arith.constant 9.99999974E-6 : f32
    %569 = vector.broadcast %cst_165 : f32 to vector<2x1xf32>
    %570 = arith.addf %566, %569 : vector<2x1xf32>
    %571 = math.rsqrt %570 : vector<2x1xf32>
    %572 = vector.broadcast %571 : vector<2x1xf32> to vector<2x32xf32>
    %573 = arith.mulf %568, %572 : vector<2x32xf32>
    %574 = vector.broadcast %273 : vector<1x32xf32> to vector<2x32xf32>
    %575 = arith.mulf %573, %574 : vector<2x32xf32>
    %576 = vector.broadcast %274 : vector<1x32xf32> to vector<2x32xf32>
    %577 = arith.addf %575, %576 : vector<2x32xf32>
    %c0_166 = arith.constant 0 : index
    %c5_167 = arith.constant 5 : index
    %c0_168 = arith.constant 0 : index
    %578 = vector.load %arg9[%c0_166, %c5_167, %c0_168] : memref<2x8x32xf32, #tpu.memory_space<vmem>>, vector<2x1x32xf32>
    %579 = vector.shape_cast %578 : vector<2x1x32xf32> to vector<2x32xf32>
    %580 = vector.shape_cast %577 : vector<2x32xf32> to vector<2x1x32xf32>
    tpu.vector_store %arg9[%c0_166, %c5_167, %c0_168], %580 {strides = array<i32>} : memref<2x8x32xf32, #tpu.memory_space<vmem>>, vector<2x1x32xf32>,
    %c6_169 = arith.constant 6 : index
    %c0_170 = arith.constant 0 : index
    %c0_171 = arith.constant 0 : index
    %581 = vector.load %arg12[%c6_169, %c0_170, %c0_171] : memref<8x2x32xf32, #tpu.memory_space<vmem>>, vector<1x2x32xf32>
    %582 = vector.shape_cast %581 : vector<1x2x32xf32> to vector<2x32xf32>
    %cst_172 = arith.constant dense<0.000000e+00> : vector<2xf32>
    %583 = vector.multi_reduction <add>, %582, %cst_172 [1] : vector<2x32xf32> to vector<2xf32>
    %584 = vector.shape_cast %583 : vector<2xf32> to vector<2x1xf32>
    %cst_173 = arith.constant 3.200000e+01 : f32
    %585 = vector.broadcast %cst_173 : f32 to vector<2x1xf32>
    %586 = arith.divf %584, %585 : vector<2x1xf32>
    %587 = vector.broadcast %586 : vector<2x1xf32> to vector<2x32xf32>
    %588 = arith.subf %582, %587 : vector<2x32xf32>
    %589 = arith.mulf %588, %588 : vector<2x32xf32>
    %cst_174 = arith.constant dense<0.000000e+00> : vector<2xf32>
    %590 = vector.multi_reduction <add>, %589, %cst_174 [1] : vector<2x32xf32> to vector<2xf32>
    %591 = vector.shape_cast %590 : vector<2xf32> to vector<2x1xf32>
    %cst_175 = arith.constant 3.200000e+01 : f32
    %592 = vector.broadcast %cst_175 : f32 to vector<2x1xf32>
    %593 = arith.divf %591, %592 : vector<2x1xf32>
    %594 = vector.broadcast %586 : vector<2x1xf32> to vector<2x32xf32>
    %595 = arith.subf %582, %594 : vector<2x32xf32>
    %cst_176 = arith.constant 9.99999974E-6 : f32
    %596 = vector.broadcast %cst_176 : f32 to vector<2x1xf32>
    %597 = arith.addf %593, %596 : vector<2x1xf32>
    %598 = math.rsqrt %597 : vector<2x1xf32>
    %599 = vector.broadcast %598 : vector<2x1xf32> to vector<2x32xf32>
    %600 = arith.mulf %595, %599 : vector<2x32xf32>
    %601 = vector.broadcast %271 : vector<1x32xf32> to vector<2x32xf32>
    %602 = arith.mulf %600, %601 : vector<2x32xf32>
    %603 = vector.broadcast %272 : vector<1x32xf32> to vector<2x32xf32>
    %604 = arith.addf %602, %603 : vector<2x32xf32>
    %605 = vector.extract_strided_slice %3 {offsets = [12, 0], sizes = [2, 32], strides = [1, 1]} : vector<16x32xf32> to vector<2x32xf32>
    %606 = arith.addf %604, %605 : vector<2x32xf32>
    %cst_177 = arith.constant dense<0.000000e+00> : vector<2xf32>
    %607 = vector.multi_reduction <add>, %606, %cst_177 [1] : vector<2x32xf32> to vector<2xf32>
    %608 = vector.shape_cast %607 : vector<2xf32> to vector<2x1xf32>
    %cst_178 = arith.constant 3.200000e+01 : f32
    %609 = vector.broadcast %cst_178 : f32 to vector<2x1xf32>
    %610 = arith.divf %608, %609 : vector<2x1xf32>
    %611 = vector.broadcast %610 : vector<2x1xf32> to vector<2x32xf32>
    %612 = arith.subf %606, %611 : vector<2x32xf32>
    %613 = arith.mulf %612, %612 : vector<2x32xf32>
    %cst_179 = arith.constant dense<0.000000e+00> : vector<2xf32>
    %614 = vector.multi_reduction <add>, %613, %cst_179 [1] : vector<2x32xf32> to vector<2xf32>
    %615 = vector.shape_cast %614 : vector<2xf32> to vector<2x1xf32>
    %cst_180 = arith.constant 3.200000e+01 : f32
    %616 = vector.broadcast %cst_180 : f32 to vector<2x1xf32>
    %617 = arith.divf %615, %616 : vector<2x1xf32>
    %618 = vector.broadcast %610 : vector<2x1xf32> to vector<2x32xf32>
    %619 = arith.subf %606, %618 : vector<2x32xf32>
    %cst_181 = arith.constant 9.99999974E-6 : f32
    %620 = vector.broadcast %cst_181 : f32 to vector<2x1xf32>
    %621 = arith.addf %617, %620 : vector<2x1xf32>
    %622 = math.rsqrt %621 : vector<2x1xf32>
    %623 = vector.broadcast %622 : vector<2x1xf32> to vector<2x32xf32>
    %624 = arith.mulf %619, %623 : vector<2x32xf32>
    %625 = vector.broadcast %273 : vector<1x32xf32> to vector<2x32xf32>
    %626 = arith.mulf %624, %625 : vector<2x32xf32>
    %627 = vector.broadcast %274 : vector<1x32xf32> to vector<2x32xf32>
    %628 = arith.addf %626, %627 : vector<2x32xf32>
    %c0_182 = arith.constant 0 : index
    %c6_183 = arith.constant 6 : index
    %c0_184 = arith.constant 0 : index
    %629 = vector.load %arg9[%c0_182, %c6_183, %c0_184] : memref<2x8x32xf32, #tpu.memory_space<vmem>>, vector<2x1x32xf32>
    %630 = vector.shape_cast %629 : vector<2x1x32xf32> to vector<2x32xf32>
    %631 = vector.shape_cast %628 : vector<2x32xf32> to vector<2x1x32xf32>
    tpu.vector_store %arg9[%c0_182, %c6_183, %c0_184], %631 {strides = array<i32>} : memref<2x8x32xf32, #tpu.memory_space<vmem>>, vector<2x1x32xf32>,
    %c7_185 = arith.constant 7 : index
    %c0_186 = arith.constant 0 : index
    %c0_187 = arith.constant 0 : index
    %632 = vector.load %arg12[%c7_185, %c0_186, %c0_187] : memref<8x2x32xf32, #tpu.memory_space<vmem>>, vector<1x2x32xf32>
    %633 = vector.shape_cast %632 : vector<1x2x32xf32> to vector<2x32xf32>
    %cst_188 = arith.constant dense<0.000000e+00> : vector<2xf32>
    %634 = vector.multi_reduction <add>, %633, %cst_188 [1] : vector<2x32xf32> to vector<2xf32>
    %635 = vector.shape_cast %634 : vector<2xf32> to vector<2x1xf32>
    %cst_189 = arith.constant 3.200000e+01 : f32
    %636 = vector.broadcast %cst_189 : f32 to vector<2x1xf32>
    %637 = arith.divf %635, %636 : vector<2x1xf32>
    %638 = vector.broadcast %637 : vector<2x1xf32> to vector<2x32xf32>
    %639 = arith.subf %633, %638 : vector<2x32xf32>
    %640 = arith.mulf %639, %639 : vector<2x32xf32>
    %cst_190 = arith.constant dense<0.000000e+00> : vector<2xf32>
    %641 = vector.multi_reduction <add>, %640, %cst_190 [1] : vector<2x32xf32> to vector<2xf32>
    %642 = vector.shape_cast %641 : vector<2xf32> to vector<2x1xf32>
    %cst_191 = arith.constant 3.200000e+01 : f32
    %643 = vector.broadcast %cst_191 : f32 to vector<2x1xf32>
    %644 = arith.divf %642, %643 : vector<2x1xf32>
    %645 = vector.broadcast %637 : vector<2x1xf32> to vector<2x32xf32>
    %646 = arith.subf %633, %645 : vector<2x32xf32>
    %cst_192 = arith.constant 9.99999974E-6 : f32
    %647 = vector.broadcast %cst_192 : f32 to vector<2x1xf32>
    %648 = arith.addf %644, %647 : vector<2x1xf32>
    %649 = math.rsqrt %648 : vector<2x1xf32>
    %650 = vector.broadcast %649 : vector<2x1xf32> to vector<2x32xf32>
    %651 = arith.mulf %646, %650 : vector<2x32xf32>
    %652 = vector.broadcast %271 : vector<1x32xf32> to vector<2x32xf32>
    %653 = arith.mulf %651, %652 : vector<2x32xf32>
    %654 = vector.broadcast %272 : vector<1x32xf32> to vector<2x32xf32>
    %655 = arith.addf %653, %654 : vector<2x32xf32>
    %656 = vector.extract_strided_slice %3 {offsets = [14, 0], sizes = [2, 32], strides = [1, 1]} : vector<16x32xf32> to vector<2x32xf32>
    %657 = arith.addf %655, %656 : vector<2x32xf32>
    %cst_193 = arith.constant dense<0.000000e+00> : vector<2xf32>
    %658 = vector.multi_reduction <add>, %657, %cst_193 [1] : vector<2x32xf32> to vector<2xf32>
    %659 = vector.shape_cast %658 : vector<2xf32> to vector<2x1xf32>
    %cst_194 = arith.constant 3.200000e+01 : f32
    %660 = vector.broadcast %cst_194 : f32 to vector<2x1xf32>
    %661 = arith.divf %659, %660 : vector<2x1xf32>
    %662 = vector.broadcast %661 : vector<2x1xf32> to vector<2x32xf32>
    %663 = arith.subf %657, %662 : vector<2x32xf32>
    %664 = arith.mulf %663, %663 : vector<2x32xf32>
    %cst_195 = arith.constant dense<0.000000e+00> : vector<2xf32>
    %665 = vector.multi_reduction <add>, %664, %cst_195 [1] : vector<2x32xf32> to vector<2xf32>
    %666 = vector.shape_cast %665 : vector<2xf32> to vector<2x1xf32>
    %cst_196 = arith.constant 3.200000e+01 : f32
    %667 = vector.broadcast %cst_196 : f32 to vector<2x1xf32>
    %668 = arith.divf %666, %667 : vector<2x1xf32>
    %669 = vector.broadcast %661 : vector<2x1xf32> to vector<2x32xf32>
    %670 = arith.subf %657, %669 : vector<2x32xf32>
    %cst_197 = arith.constant 9.99999974E-6 : f32
    %671 = vector.broadcast %cst_197 : f32 to vector<2x1xf32>
    %672 = arith.addf %668, %671 : vector<2x1xf32>
    %673 = math.rsqrt %672 : vector<2x1xf32>
    %674 = vector.broadcast %673 : vector<2x1xf32> to vector<2x32xf32>
    %675 = arith.mulf %670, %674 : vector<2x32xf32>
    %676 = vector.broadcast %273 : vector<1x32xf32> to vector<2x32xf32>
    %677 = arith.mulf %675, %676 : vector<2x32xf32>
    %678 = vector.broadcast %274 : vector<1x32xf32> to vector<2x32xf32>
    %679 = arith.addf %677, %678 : vector<2x32xf32>
    %c0_198 = arith.constant 0 : index
    %c7_199 = arith.constant 7 : index
    %c0_200 = arith.constant 0 : index
    %680 = vector.load %arg9[%c0_198, %c7_199, %c0_200] : memref<2x8x32xf32, #tpu.memory_space<vmem>>, vector<2x1x32xf32>
    %681 = vector.shape_cast %680 : vector<2x1x32xf32> to vector<2x32xf32>
    %682 = vector.shape_cast %679 : vector<2x32xf32> to vector<2x1x32xf32>
    tpu.vector_store %arg9[%c0_198, %c7_199, %c0_200], %682 {strides = array<i32>} : memref<2x8x32xf32, #tpu.memory_space<vmem>>, vector<2x1x32xf32>,
    return
  }
  func.func @transform_0(%arg0: i32) -> (i32, i32) {
    %c0_i32 = arith.constant 0 : i32
    %c0_i32_0 = arith.constant 0 : i32
    return %arg0, %c0_i32 : i32, i32
  }
  func.func @transform_1(%arg0: i32) -> (i32, i32) {
    %c0_i32 = arith.constant 0 : i32
    %c0_i32_0 = arith.constant 0 : i32
    %c0_i32_1 = arith.constant 0 : i32
    return %c0_i32, %c0_i32_0 : i32, i32
  }
  func.func @transform_2(%arg0: i32) -> (i32, i32) {
    %c0_i32 = arith.constant 0 : i32
    %c0_i32_0 = arith.constant 0 : i32
    %c0_i32_1 = arith.constant 0 : i32
    return %c0_i32, %c0_i32_0 : i32, i32
  }
  func.func @transform_3(%arg0: i32) -> (i32, i32) {
    %c0_i32 = arith.constant 0 : i32
    %c0_i32_0 = arith.constant 0 : i32
    %c0_i32_1 = arith.constant 0 : i32
    return %c0_i32, %c0_i32_0 : i32, i32
  }
  func.func @transform_4(%arg0: i32) -> (i32, i32) {
    %c0_i32 = arith.constant 0 : i32
    %c0_i32_0 = arith.constant 0 : i32
    %c0_i32_1 = arith.constant 0 : i32
    return %c0_i32, %c0_i32_0 : i32, i32
  }
  func.func @transform_5(%arg0: i32) -> (i32, i32) {
    %c0_i32 = arith.constant 0 : i32
    %c0_i32_0 = arith.constant 0 : i32
    %c0_i32_1 = arith.constant 0 : i32
    return %c0_i32, %c0_i32_0 : i32, i32
  }
  func.func @transform_6(%arg0: i32) -> (i32, i32) {
    %c0_i32 = arith.constant 0 : i32
    %c0_i32_0 = arith.constant 0 : i32
    %c0_i32_1 = arith.constant 0 : i32
    return %c0_i32, %c0_i32_0 : i32, i32
  }
  func.func @transform_7(%arg0: i32) -> (i32, i32) {
    %c0_i32 = arith.constant 0 : i32
    %c0_i32_0 = arith.constant 0 : i32
    %c0_i32_1 = arith.constant 0 : i32
    return %c0_i32, %c0_i32_0 : i32, i32
  }
  func.func @transform_8(%arg0: i32) -> (i32, i32, i32) {
    %c0_i32 = arith.constant 0 : i32
    %c0_i32_0 = arith.constant 0 : i32
    %c0_i32_1 = arith.constant 0 : i32
    return %c0_i32, %arg0, %c0_i32_0 : i32, i32, i32
  }
}

</mosaic_0001>

<llo_original>
// kernel: lstm_block_forward.2
$region0: #{lstm_block_forward.2}
  #allocation0 [shape = 'u32[]', space=smem, size = 0x4, offset = 0x4, fixed_abs, tag = 'smem constant byte address 0x4 - core index']
  #allocation1 [shape = 'u32[144,128]{1,0:T(1,128)}', space=vmem, size = 0x12000, scoped, tag = 'internal scratch']
  #allocation2 [shape = 'f32[1]{0:T(128)S(6)}', space=smem, size = 0x200, scoped, tag = 'scoped memory for lstm_block_forward.2']
  #allocation3 [shape = 'f32[1]{0:T(128)S(6)}', space=smem, size = 0x200, scoped, tag = 'scoped memory for lstm_block_forward.2']
  %s0 = inlined_call_operand.vmem [shape: f32[16,16], index: 0, kind: input, shape index: {}]
  %s1 = inlined_call_operand.vmem [shape: bf16[16,32], index: 1, kind: input, shape index: {}]
  %s2 = inlined_call_operand.vmem [shape: f32[1,32], index: 2, kind: input, shape index: {}]
  %s3 = inlined_call_operand.<no memory space> [shape: f32[1], index: 3, kind: input, shape index: {}]
  %s4 = inlined_call_operand.vmem [shape: bf16[32,32], index: 4, kind: input, shape index: {}]
  %s5 = inlined_call_operand.vmem [shape: f32[1,32], index: 5, kind: input, shape index: {}]
  %s6 = inlined_call_operand.<no memory space> [shape: f32[1], index: 6, kind: input, shape index: {}]
  %s7 = inlined_call_operand.vmem [shape: f32[1,32], index: 7, kind: input, shape index: {}]
  %s8 = inlined_call_operand.vmem [shape: f32[1,32], index: 8, kind: input, shape index: {}]
  %s9 = inlined_call_operand.vmem [shape: f32[16,32], index: 9, kind: output, shape index: {}]
  %s10 = sld [smem:[#allocation0]]
  $region46: #{lstm_block_forward.2} parent=0
    _
  %s12 = ssub.s32 1, %s10
  %s13 = scalar_select 0, %s12, %s10
  %14 = sst [smem:[#allocation2]] %s3
  %15 = sst [smem:[#allocation3]] %s6
  // Predicated region
  $region2: #{lstm_block_forward.2} parent=0 // pred_check
    _
  $region3: #{lstm_block_forward.2} parent=0 // pred_check_branch
    %17 = sbr.rel (0) target = $region5
  $region4: #{lstm_block_forward.2} parent=0 // pred_region
    _
  $region5: #{lstm_block_forward.2} parent=0 // pred_fallthru
    _
  // Predicated region
  $region6: #{lstm_block_forward.2} parent=0 // pred_check
    _
  $region7: #{lstm_block_forward.2} parent=0 // pred_check_branch
    %19 = sbr.rel (0) target = $region9
  $region8: #{lstm_block_forward.2} parent=0 // pred_region
    _
  $region9: #{lstm_block_forward.2} parent=0 // pred_fallthru
    _
  // Predicated region
  $region10: #{lstm_block_forward.2} parent=0 // pred_check
    _
  $region11: #{lstm_block_forward.2} parent=0 // pred_check_branch
    %21 = sbr.rel (0) target = $region13
  $region12: #{lstm_block_forward.2} parent=0 // pred_region
    _
  $region13: #{lstm_block_forward.2} parent=0 // pred_fallthru
    _
  // Predicated region
  $region14: #{lstm_block_forward.2} parent=0 // pred_check
    _
  $region15: #{lstm_block_forward.2} parent=0 // pred_check_branch
    %23 = sbr.rel (0) target = $region17
  $region16: #{lstm_block_forward.2} parent=0 // pred_region
    _
  $region17: #{lstm_block_forward.2} parent=0 // pred_fallthru
    _
  // Predicated region
  $region18: #{lstm_block_forward.2} parent=0 // pred_check
    _
  $region19: #{lstm_block_forward.2} parent=0 // pred_check_branch
    %25 = sbr.rel (0) target = $region21
  $region20: #{lstm_block_forward.2} parent=0 // pred_region
    _
  $region21: #{lstm_block_forward.2} parent=0 // pred_fallthru
    _
  // Predicated region
  $region22: #{lstm_block_forward.2} parent=0 // pred_check
    _
  $region23: #{lstm_block_forward.2} parent=0 // pred_check_branch
    %27 = sbr.rel (0) target = $region25
  $region24: #{lstm_block_forward.2} parent=0 // pred_region
    _
  $region25: #{lstm_block_forward.2} parent=0 // pred_fallthru
    _
  // Predicated region
  $region26: #{lstm_block_forward.2} parent=0 // pred_check
    _
  $region27: #{lstm_block_forward.2} parent=0 // pred_check_branch
    %29 = sbr.rel (0) target = $region29
  $region28: #{lstm_block_forward.2} parent=0 // pred_region
    _
  $region29: #{lstm_block_forward.2} parent=0 // pred_fallthru
    _
  // Predicated region
  $region30: #{lstm_block_forward.2} parent=0 // pred_check
    _
  $region31: #{lstm_block_forward.2} parent=0 // pred_check_branch
    %31 = sbr.rel (0) target = $region33
  $region32: #{lstm_block_forward.2} parent=0 // pred_region
    _
  $region33: #{lstm_block_forward.2} parent=0 // pred_fallthru
    _
  // Predicated region
  $region34: #{lstm_block_forward.2} parent=0 // pred_check
    _
  $region35: #{lstm_block_forward.2} parent=0 // pred_check_branch
    %33 = sbr.rel (0) target = $region37
  $region36: #{lstm_block_forward.2} parent=0 // pred_region
    _
  $region37: #{lstm_block_forward.2} parent=0 // pred_fallthru
    _
  %v35 = vld [vmem:[%s0] sm:$0xff]
  %v36 = vld [vmem:[%s0 + $0x8] sm:$0xff]
  %v37 = vpack.c.bf16 %v36, %v35
  %v38 = vld [vmem:[%s1] sm:$0xf]
  %v39 = vld [vmem:[%s1 + $0x4] sm:$0xf]
  %v40 = vld [vmem:[%s2] sm:$0x1]
  %v42 = vlaneseq
  %v43 = vshrl.u32 %v42, 7
  %v44 = vsub.s32 0, %v43
  %v45 = vrot.slane %v40, %v44
  %v49 = vunpack.c.l.b16 %v38
  %v50 = vunpack.c.l.b16 %v39
  %v51 = vpack.c.b16 %v50, %v49
  %vm53 = vcmask 130048
  %v55 = vsel %vm53, %v37, 0
  %57 = vmatprep.subr.bf16.mxu0 0
  %58 = vmatpush1.bf16.msra.mxu0 %v51
  %59 = vmatprep.subr.bf16.mxu0 0
  %60 = vmatpush1.bf16.msra.mxu0 0
  %61 = vmatprep.subr.bf16.mxu0 0
  %62 = vmatpush1.bf16.msra.mxu0 0
  %63 = vmatprep.subr.bf16.mxu0 0
  %64 = vmatpush1.bf16.msra.mxu0 0
  %65 = vmatprep.subr.bf16.mxu0 0
  %66 = vmatpush1.bf16.msra.mxu0 0
  %67 = vmatprep.subr.bf16.mxu0 0
  %68 = vmatpush1.bf16.msra.mxu0 0
  %69 = vmatprep.subr.bf16.mxu0 0
  %70 = vmatpush1.bf16.msra.mxu0 0
  %71 = vmatprep.subr.bf16.mxu0 0
  %72 = vmatpush1.bf16.msra.mxu0 0
  %73 = vmatprep.subr.bf16.mxu0 0
  %74 = vmatpush1.bf16.msra.mxu0 0
  %75 = vmatprep.subr.bf16.mxu0 0
  %76 = vmatpush1.bf16.msra.mxu0 0
  %77 = vmatprep.subr.bf16.mxu0 0
  %78 = vmatpush1.bf16.msra.mxu0 0
  %79 = vmatprep.subr.bf16.mxu0 0
  %80 = vmatpush1.bf16.msra.mxu0 0
  %81 = vmatprep.subr.bf16.mxu0 0
  %82 = vmatpush1.bf16.msra.mxu0 0
  %83 = vmatprep.subr.bf16.mxu0 0
  %84 = vmatpush1.bf16.msra.mxu0 0
  %85 = vmatprep.subr.bf16.mxu0 0
  %86 = vmatpush1.bf16.msra.mxu0 0
  %87 = vmatprep.subr.bf16.mxu0 0
  %88 = vmatpush1.bf16.msra.mxu0 0
  %89 = vmatprep.mubr.bf16.mxu0 0
  %90 = vmatmul.mubr.bf16.gmra.mrb[0].mxu0 %v55
  %v91 = vpop.f32.mrb[0].mxu0
  %v92 = vadd.f32 %v45, %v91
  %v93 = vpop.f32.mrb[0].mxu0
  %v94 = vpop.f32.mrb[0].mxu0
  %v95 = vadd.f32 %v45, %v94
  %v96 = vpop.f32.mrb[0].mxu0
  %97 = vdwg.mxu0
  %s98 = sld [smem:[#allocation2]]
  %vm99 = vcmp.ge.f32.partialorder %v92, 0.0
  %vm100 = vcmp.ge.f32.partialorder %v95, 0.0
  %v101 = vstv %s98
  %v102 = vmul.f32 %v101, %v92
  %v103 = vmul.f32 %v101, %v95
  %v104 = vsel %vm99, %v92, %v102
  %v105 = vsel %vm100, %v95, %v103
  %v106 = vpack.c.bf16 %v105, %v104
  %v107 = vld [vmem:[%s4] sm:$0xf]
  %v108 = vld [vmem:[%s4 + $0x4] sm:$0xf]
  %v109 = vld [vmem:[%s4 + $0x8] sm:$0xf]
  %v110 = vld [vmem:[%s4 + $0xc] sm:$0xf]
  %v111 = vld [vmem:[%s5] sm:$0x1]
  %v113 = vlaneseq
  %v114 = vshrl.u32 %v113, 7
  %v115 = vsub.s32 0, %v114
  %v116 = vrot.slane %v111, %v115
  %v122 = vunpack.c.l.b16 %v107
  %v123 = vunpack.c.l.b16 %v108
  %v124 = vunpack.c.l.b16 %v109
  %v125 = vunpack.c.l.b16 %v110
  %v126 = vpack.c.b16 %v123, %v122
  %v127 = vpack.c.b16 %v125, %v124
  %vm130 = vcmask 261120
  %v132 = vsel %vm130, %v106, 0
  %134 = vmatprep.subr.bf16.mxu0 0
  %135 = vmatpush1.bf16.msra.mxu0 %v126
  %136 = vmatprep.subr.bf16.mxu0 0
  %137 = vmatpush1.bf16.msra.mxu0 %v127
  %138 = vmatprep.subr.bf16.mxu0 0
  %139 = vmatpush1.bf16.msra.mxu0 0
  %140 = vmatprep.subr.bf16.mxu0 0
  %141 = vmatpush1.bf16.msra.mxu0 0
  %142 = vmatprep.subr.bf16.mxu0 0
  %143 = vmatpush1.bf16.msra.mxu0 0
  %144 = vmatprep.subr.bf16.mxu0 0
  %145 = vmatpush1.bf16.msra.mxu0 0
  %146 = vmatprep.subr.bf16.mxu0 0
  %147 = vmatpush1.bf16.msra.mxu0 0
  %148 = vmatprep.subr.bf16.mxu0 0
  %149 = vmatpush1.bf16.msra.mxu0 0
  %150 = vmatprep.subr.bf16.mxu0 0
  %151 = vmatpush1.bf16.msra.mxu0 0
  %152 = vmatprep.subr.bf16.mxu0 0
  %153 = vmatpush1.bf16.msra.mxu0 0
  %154 = vmatprep.subr.bf16.mxu0 0
  %155 = vmatpush1.bf16.msra.mxu0 0
  %156 = vmatprep.subr.bf16.mxu0 0
  %157 = vmatpush1.bf16.msra.mxu0 0
  %158 = vmatprep.subr.bf16.mxu0 0
  %159 = vmatpush1.bf16.msra.mxu0 0
  %160 = vmatprep.subr.bf16.mxu0 0
  %161 = vmatpush1.bf16.msra.mxu0 0
  %162 = vmatprep.subr.bf16.mxu0 0
  %163 = vmatpush1.bf16.msra.mxu0 0
  %164 = vmatprep.subr.bf16.mxu0 0
  %165 = vmatpush1.bf16.msra.mxu0 0
  %166 = vmatprep.mubr.bf16.mxu0 0
  %167 = vmatmul.mubr.bf16.gmra.mrb[0].mxu0 %v132
  %v168 = vpop.f32.mrb[0].mxu0
  %v169 = vadd.f32 %v116, %v168
  %v170 = vpop.f32.mrb[0].mxu0
  %v171 = vpop.f32.mrb[0].mxu0
  %v172 = vadd.f32 %v116, %v171
  %v173 = vpop.f32.mrb[0].mxu0
  %174 = vdwg.mxu0
  %s175 = sld [smem:[#allocation3]]
  %vm176 = vcmp.ge.f32.partialorder %v169, 0.0
  %vm177 = vcmp.ge.f32.partialorder %v172, 0.0
  %v178 = vstv %s175
  %v179 = vmul.f32 %v178, %v169
  %v180 = vmul.f32 %v178, %v172
  %v181 = vsel %vm176, %v169, %v179
  %v182 = vsel %vm177, %v172, %v180
  %v183 = vld [vmem:[%s7] sm:$0x1]
  %v184 = vld [vmem:[%s8] sm:$0x1]
  %v185 = vsel %vm130, %v181, 0.0
  %186 = vadd.xlane.f32.xlu0 %v185
  %v187 = vpop.xlane.xlu0 %186
  %v188 = vsel %vm130, %v182, 0.0
  %189 = vadd.xlane.f32.xlu0 %v188
  %v190 = vpop.xlane.xlu0 %189
  %v191 = vrcp.pop 32.0
  %v192 = vmul.f32 %v187, %v191
  %v193 = vmul.f32 %v190, %v191
  %v194 = vsub.f32 %v181, %v192
  %v195 = vsub.f32 %v182, %v193
  %v196 = vmul.f32 %v194, %v194
  %v197 = vmul.f32 %v195, %v195
  %v198 = vsel %vm130, %v196, 0.0
  %199 = vadd.xlane.f32.xlu0 %v198
  %v200 = vpop.xlane.xlu0 %199
  %v201 = vsel %vm130, %v197, 0.0
  %202 = vadd.xlane.f32.xlu0 %v201
  %v203 = vpop.xlane.xlu0 %202
  %v204 = vmul.f32 %v200, %v191
  %v205 = vmul.f32 %v203, %v191
  %v206 = vadd.f32 %v204, 1e-05
  %v207 = vadd.f32 %v205, 1e-05
  %v208 = vrsqrt.pop %v206
  %v209 = vrsqrt.pop %v207
  %v210 = vmul.f32 %v194, %v208
  %v211 = vmul.f32 %v195, %v209
  %v213 = vlaneseq
  %v214 = vshrl.u32 %v213, 7
  %v215 = vsub.s32 0, %v214
  %v216 = vrot.slane %v183, %v215
  %v218 = vmul.f32 %v210, %v216
  %v219 = vmul.f32 %v211, %v216
  %v221 = vlaneseq
  %v222 = vshrl.u32 %v221, 7
  %v223 = vsub.s32 0, %v222
  %v224 = vrot.slane %v184, %v223
  %v226 = vadd.f32 %v218, %v224
  %v227 = vadd.f32 %v219, %v224
  %228 = vst.msk [vmem:[%s9] sm:$0xff] %vm130, %v226
  %229 = vst.msk [vmem:[%s9 + $0x8] sm:$0xff] %vm130, %v227
  // Predicated region
  $region38: #{lstm_block_forward.2} parent=0 // pred_check
    _
  $region39: #{lstm_block_forward.2} parent=0 // pred_check_branch
    %231 = sbr.rel (0) target = $region41
  $region40: #{lstm_block_forward.2} parent=0 // pred_region
    _
  $region41: #{lstm_block_forward.2} parent=0 // pred_fallthru
    _
  // Predicated region
  $region42: #{lstm_block_forward.2} parent=0 // pred_check
    _
  $region43: #{lstm_block_forward.2} parent=0 // pred_check_branch
    %233 = sbr.rel (0) target = $region45
  $region44: #{lstm_block_forward.2} parent=0 // pred_region
    _
  $region45: #{lstm_block_forward.2} parent=0 // pred_fallthru
    _

// kernel: lstm_block_forward.3
$region0: #{lstm_block_forward.3}
  #allocation0 [shape = 'u32[]', space=smem, size = 0x4, offset = 0x4, fixed_abs, tag = 'smem constant byte address 0x4 - core index']
  #allocation1 [shape = 'u32[144,128]{1,0:T(1,128)}', space=vmem, size = 0x12000, scoped, tag = 'internal scratch']
  #allocation2 [shape = 'f32[2,32]{1,0:T(2,128)}', space=vmem, size = 0x400, scoped, tag = 'scratch operand']
  #allocation3 [shape = 'f32[2,32]{1,0:T(2,128)}', space=vmem, size = 0x400, scoped, tag = 'scratch operand']
  #allocation4 [shape = 'f32[8,2,32]{2,1,0:T(2,128)}', space=vmem, size = 0x2000, scoped, tag = 'scratch operand']
  %s0 = inlined_call_operand.vmem [shape: f32[16,32], index: 0, kind: input, shape index: {}]
  %s1 = inlined_call_operand.vmem [shape: bf16[32,128], index: 1, kind: input, shape index: {}]
  %s2 = inlined_call_operand.vmem [shape: f32[1,128], index: 2, kind: input, shape index: {}]
  %s3 = inlined_call_operand.vmem [shape: bf16[32,128], index: 3, kind: input, shape index: {}]
  %s4 = inlined_call_operand.vmem [shape: f32[1,32], index: 4, kind: input, shape index: {}]
  %s5 = inlined_call_operand.vmem [shape: f32[1,32], index: 5, kind: input, shape index: {}]
  %s6 = inlined_call_operand.vmem [shape: f32[1,32], index: 6, kind: input, shape index: {}]
  %s7 = inlined_call_operand.vmem [shape: f32[1,32], index: 7, kind: input, shape index: {}]
  %s8 = inlined_call_operand.hbm [shape: f32[2,8,32], index: 8, kind: output, shape index: {}]
  %s9 = sld [smem:[#allocation0]]
  $region46: #{lstm_block_forward.3} parent=0
    _
  %s11 = ssub.s32 1, %s9
  %s12 = scalar_select 0, %s11, %s9
  $region1: #{lstm_block_forward.3} parent=0
    #allocation5 [shape = 'u8[8192]{0}', space=vmem, size = 0x2000, scoped, tag = 'output window, operand 0, single buffered']
    #allocation6 [shape = 's32[1]{0}', space=sflag, size = 0x4, scoped, tag = 'scoped memory for lstm_block_forward.3']
    %13 = vsyncpa [#allocation6], 0
    // Predicated region
    $region2: #{lstm_block_forward.3} parent=1 // pred_check
      _
    $region3: #{lstm_block_forward.3} parent=1 // pred_check_branch
      %15 = sbr.rel (0) target = $region5
    $region4: #{lstm_block_forward.3} parent=1 // pred_region
      _
    $region5: #{lstm_block_forward.3} parent=1 // pred_fallthru
      _
    // Predicated region
    $region6: #{lstm_block_forward.3} parent=1 // pred_check
      _
    $region7: #{lstm_block_forward.3} parent=1 // pred_check_branch
      %17 = sbr.rel (0) target = $region9
    $region8: #{lstm_block_forward.3} parent=1 // pred_region
      _
    $region9: #{lstm_block_forward.3} parent=1 // pred_fallthru
      _
    // Predicated region
    $region10: #{lstm_block_forward.3} parent=1 // pred_check
      _
    $region11: #{lstm_block_forward.3} parent=1 // pred_check_branch
      %19 = sbr.rel (0) target = $region13
    $region12: #{lstm_block_forward.3} parent=1 // pred_region
      _
    $region13: #{lstm_block_forward.3} parent=1 // pred_fallthru
      _
    // Predicated region
    $region14: #{lstm_block_forward.3} parent=1 // pred_check
      _
    $region15: #{lstm_block_forward.3} parent=1 // pred_check_branch
      %21 = sbr.rel (0) target = $region17
    $region16: #{lstm_block_forward.3} parent=1 // pred_region
      _
    $region17: #{lstm_block_forward.3} parent=1 // pred_fallthru
      _
    // Predicated region
    $region18: #{lstm_block_forward.3} parent=1 // pred_check
      _
    $region19: #{lstm_block_forward.3} parent=1 // pred_check_branch
      %23 = sbr.rel (0) target = $region21
    $region20: #{lstm_block_forward.3} parent=1 // pred_region
      _
    $region21: #{lstm_block_forward.3} parent=1 // pred_fallthru
      _
    // Predicated region
    $region22: #{lstm_block_forward.3} parent=1 // pred_check
      _
    $region23: #{lstm_block_forward.3} parent=1 // pred_check_branch
      %25 = sbr.rel (0) target = $region25
    $region24: #{lstm_block_forward.3} parent=1 // pred_region
      _
    $region25: #{lstm_block_forward.3} parent=1 // pred_fallthru
      _
    // Predicated region
    $region26: #{lstm_block_forward.3} parent=1 // pred_check
      _
    $region27: #{lstm_block_forward.3} parent=1 // pred_check_branch
      %27 = sbr.rel (0) target = $region29
    $region28: #{lstm_block_forward.3} parent=1 // pred_region
      _
    $region29: #{lstm_block_forward.3} parent=1 // pred_fallthru
      _
    // Predicated region
    $region30: #{lstm_block_forward.3} parent=1 // pred_check
      _
    $region31: #{lstm_block_forward.3} parent=1 // pred_check_branch
      %29 = sbr.rel (0) target = $region33
    $region32: #{lstm_block_forward.3} parent=1 // pred_region
      _
    $region33: #{lstm_block_forward.3} parent=1 // pred_fallthru
      _
    %p31 = scmp.eq.s32.totalorder 0, 0
    // Predicated region
    $region34: #{lstm_block_forward.3} parent=1 // pred_check
      %p32 = pneg %p31
    $region35: #{lstm_block_forward.3} parent=1 // pred_check_branch
      %34 = sbr.rel (%p32) target = $region37
    $region36: #{lstm_block_forward.3} parent=1 // pred_region
      %vm35 = vcmask 254976
      %36 = vst.msk [vmem:[#allocation2] sm:$0x3] %vm35, 0.0
      %37 = vst.msk [vmem:[#allocation3] sm:$0x3] %vm35, 0.0
    $region37: #{lstm_block_forward.3} parent=1 // pred_fallthru
      _
    %v38 = vld [vmem:[%s0] sm:$0xff]
    %v39 = vld [vmem:[%s0 + $0x8] sm:$0xff]
    %v40 = vld [vmem:[%s1] sm:$0xf]
    %v41 = vld [vmem:[%s1 + $0x4] sm:$0xf]
    %v42 = vld [vmem:[%s1 + $0x8] sm:$0xf]
    %v43 = vld [vmem:[%s1 + $0xc] sm:$0xf]
    %v44 = vld [vmem:[%s3] sm:$0xf]
    %v45 = vld [vmem:[%s3 + $0x4] sm:$0xf]
    %v46 = vld [vmem:[%s3 + $0x8] sm:$0xf]
    %v47 = vld [vmem:[%s3 + $0xc] sm:$0xf]
    %v48 = vpack.c.bf16 %v39, %v38
    %v49 = vld [vmem:[%s2] sm:$0x1]
    %v51 = vlaneseq
    %v52 = vshrl.u32 %v51, 7
    %v53 = vsub.s32 0, %v52
    %v54 = vrot.slane %v49, %v53
    %v60 = vunpack.c.l.b16 %v40
    %v61 = vunpack.c.l.b16 %v41
    %v62 = vunpack.c.l.b16 %v42
    %v63 = vunpack.c.l.b16 %v43
    %v64 = vpack.c.b16 %v61, %v60
    %v65 = vpack.c.b16 %v63, %v62
    %vm68 = vcmask 261120
    %v70 = vsel %vm68, %v48, 0
    %72 = vmatprep.subr.bf16.mxu0 0
    %73 = vmatpush1.bf16.msra.mxu0 %v64
    %74 = vmatprep.subr.bf16.mxu0 0
    %75 = vmatpush1.bf16.msra.mxu0 %v65
    %76 = vmatprep.subr.bf16.mxu0 0
    %77 = vmatpush1.bf16.msra.mxu0 0
    %78 = vmatprep.subr.bf16.mxu0 0
    %79 = vmatpush1.bf16.msra.mxu0 0
    %80 = vmatprep.subr.bf16.mxu0 0
    %81 = vmatpush1.bf16.msra.mxu0 0
    %82 = vmatprep.subr.bf16.mxu0 0
    %83 = vmatpush1.bf16.msra.mxu0 0
    %84 = vmatprep.subr.bf16.mxu0 0
    %85 = vmatpush1.bf16.msra.mxu0 0
    %86 = vmatprep.subr.bf16.mxu0 0
    %87 = vmatpush1.bf16.msra.mxu0 0
    %88 = vmatprep.subr.bf16.mxu0 0
    %89 = vmatpush1.bf16.msra.mxu0 0
    %90 = vmatprep.subr.bf16.mxu0 0
    %91 = vmatpush1.bf16.msra.mxu0 0
    %92 = vmatprep.subr.bf16.mxu0 0
    %93 = vmatpush1.bf16.msra.mxu0 0
    %94 = vmatprep.subr.bf16.mxu0 0
    %95 = vmatpush1.bf16.msra.mxu0 0
    %96 = vmatprep.subr.bf16.mxu0 0
    %97 = vmatpush1.bf16.msra.mxu0 0
    %98 = vmatprep.subr.bf16.mxu0 0
    %99 = vmatpush1.bf16.msra.mxu0 0
    %100 = vmatprep.subr.bf16.mxu0 0
    %101 = vmatpush1.bf16.msra.mxu0 0
    %102 = vmatprep.subr.bf16.mxu0 0
    %103 = vmatpush1.bf16.msra.mxu0 0
    %104 = vmatprep.mubr.bf16.mxu0 0
    %105 = vmatmul.mubr.bf16.gmra.mrb[0].mxu0 %v70
    %v106 = vpop.f32.mrb[0].mxu0
    %v107 = vadd.f32 %v54, %v106
    %v108 = vpop.f32.mrb[0].mxu0
    %v109 = vpop.f32.mrb[0].mxu0
    %v110 = vadd.f32 %v54, %v109
    %v111 = vpop.f32.mrb[0].mxu0
    %112 = vdwg.mxu0
    %v113 = vld [vmem:[#allocation2] sm:$0x3]
    %v114 = vld [vmem:[#allocation3] sm:$0x3]
    %v115 = vpack.c.bf16 %v113, %v113
    %v120 = vunpack.c.l.b16 %v44
    %v121 = vunpack.c.l.b16 %v45
    %v122 = vunpack.c.l.b16 %v46
    %v123 = vunpack.c.l.b16 %v47
    %v124 = vpack.c.b16 %v121, %v120
    %v125 = vpack.c.b16 %v123, %v122
    %v129 = vsel %vm68, %v115, 0
    %131 = vmatprep.subr.bf16.mxu0 0
    %132 = vmatpush1.bf16.msra.mxu0 %v124
    %133 = vmatprep.subr.bf16.mxu0 0
    %134 = vmatpush1.bf16.msra.mxu0 %v125
    %135 = vmatprep.subr.bf16.mxu0 0
    %136 = vmatpush1.bf16.msra.mxu0 0
    %137 = vmatprep.subr.bf16.mxu0 0
    %138 = vmatpush1.bf16.msra.mxu0 0
    %139 = vmatprep.subr.bf16.mxu0 0
    %140 = vmatpush1.bf16.msra.mxu0 0
    %141 = vmatprep.subr.bf16.mxu0 0
    %142 = vmatpush1.bf16.msra.mxu0 0
    %143 = vmatprep.subr.bf16.mxu0 0
    %144 = vmatpush1.bf16.msra.mxu0 0
    %145 = vmatprep.subr.bf16.mxu0 0
    %146 = vmatpush1.bf16.msra.mxu0 0
    %147 = vmatprep.subr.bf16.mxu0 0
    %148 = vmatpush1.bf16.msra.mxu0 0
    %149 = vmatprep.subr.bf16.mxu0 0
    %150 = vmatpush1.bf16.msra.mxu0 0
    %151 = vmatprep.subr.bf16.mxu0 0
    %152 = vmatpush1.bf16.msra.mxu0 0
    %153 = vmatprep.subr.bf16.mxu0 0
    %154 = vmatpush1.bf16.msra.mxu0 0
    %155 = vmatprep.subr.bf16.mxu0 0
    %156 = vmatpush1.bf16.msra.mxu0 0
    %157 = vmatprep.subr.bf16.mxu0 0
    %158 = vmatpush1.bf16.msra.mxu0 0
    %159 = vmatprep.subr.bf16.mxu0 0
    %160 = vmatpush1.bf16.msra.mxu0 0
    %161 = vmatprep.subr.bf16.mxu0 0
    %162 = vmatpush1.bf16.msra.mxu0 0
    %163 = vmatprep.mubr.bf16.mxu0 0
    %164 = vmatmul.mubr.bf16.gmra.mrb[0].mxu0 %v129
    %v165 = vpop.f32.mrb[0].mxu0
    %v166 = vadd.f32 0.0, %v165
    %v167 = vpop.f32.mrb[0].mxu0
    %v168 = vpop.f32.mrb[0].mxu0
    %v169 = vpop.f32.mrb[0].mxu0
    %170 = vdwg.mxu0
    %v171 = vadd.f32 %v107, %v166
    %v172 = vxor.u32 %v171, 2147483648
    %v173 = vmul.f32 %v172, 1.442695
    %v174 = vpow.pop %v173
    %v175 = vadd.f32 %v174, 1.0
    %v176 = vrcp.pop %v175
    %v177 = vmul.f32 1.0, %v176
    %v178 = vtanh.pop %v171
    %180 = vrot.lane.b32.xlu0 %v114, 32
    %v181 = vpop.permute.xlu0 %180
    %v183 = vmul.f32 %v177, %v181
    %185 = vrot.lane.b32.xlu0 %v178, 64
    %v186 = vpop.permute.xlu0 %185
    %v188 = vmul.f32 %v177, %v186
    %190 = vrot.lane.b32.xlu0 %v188, 32
    %v191 = vpop.permute.xlu0 %190
    %v193 = vadd.f32 %v183, %v191
    %v194 = vtanh.pop %v193
    %196 = vrot.lane.b32.xlu0 %v194, 64
    %v197 = vpop.permute.xlu0 %196
    %v199 = vmul.f32 %v177, %v197
    %201 = vrot.lane.b32.xlu0 %v199, 32
    %v202 = vpop.permute.xlu0 %201
    %vm204 = vcmask 254976
    %205 = vst.msk [vmem:[#allocation4] sm:$0x3] %vm204, %v202
    %v206 = vpack.c.bf16 %v199, %v199
    %208 = vrot.lane.b32.xlu0 %v206, 32
    %v209 = vpop.permute.xlu0 %208
    %v211 = vsel %vm68, %v209, 0
    %213 = vmatprep.subr.bf16.mxu0 0
    %214 = vmatpush1.bf16.msra.mxu0 %v124
    %215 = vmatprep.subr.bf16.mxu0 0
    %216 = vmatpush1.bf16.msra.mxu0 %v125
    %217 = vmatprep.subr.bf16.mxu0 0
    %218 = vmatpush1.bf16.msra.mxu0 0
    %219 = vmatprep.subr.bf16.mxu0 0
    %220 = vmatpush1.bf16.msra.mxu0 0
    %221 = vmatprep.subr.bf16.mxu0 0
    %222 = vmatpush1.bf16.msra.mxu0 0
    %223 = vmatprep.subr.bf16.mxu0 0
    %224 = vmatpush1.bf16.msra.mxu0 0
    %225 = vmatprep.subr.bf16.mxu0 0
    %226 = vmatpush1.bf16.msra.mxu0 0
    %227 = vmatprep.subr.bf16.mxu0 0
    %228 = vmatpush1.bf16.msra.mxu0 0
    %229 = vmatprep.subr.bf16.mxu0 0
    %230 = vmatpush1.bf16.msra.mxu0 0
    %231 = vmatprep.subr.bf16.mxu0 0
    %232 = vmatpush1.bf16.msra.mxu0 0
    %233 = vmatprep.subr.bf16.mxu0 0
    %234 = vmatpush1.bf16.msra.mxu0 0
    %235 = vmatprep.subr.bf16.mxu0 0
    %236 = vmatpush1.bf16.msra.mxu0 0
    %237 = vmatprep.subr.bf16.mxu0 0
    %238 = vmatpush1.bf16.msra.mxu0 0
    %239 = vmatprep.subr.bf16.mxu0 0
    %240 = vmatpush1.bf16.msra.mxu0 0
    %241 = vmatprep.subr.bf16.mxu0 0
    %242 = vmatpush1.bf16.msra.mxu0 0
    %243 = vmatprep.subr.bf16.mxu0 0
    %244 = vmatpush1.bf16.msra.mxu0 0
    %245 = vmatprep.mubr.bf16.mxu0 0
    %246 = vmatmul.mubr.bf16.gmra.mrb[0].mxu0 %v211
    %v247 = vpop.f32.mrb[0].mxu0
    %v248 = vadd.f32 0.0, %v247
    %v249 = vpop.f32.mrb[0].mxu0
    %v250 = vpop.f32.mrb[0].mxu0
    %v251 = vpop.f32.mrb[0].mxu0
    %252 = vdwg.mxu0
    %v254 = vrot.slane %v248, 6
    %v256 = vadd.f32 %v107, %v254
    %v257 = vxor.u32 %v256, 2147483648
    %v258 = vmul.f32 %v257, 1.442695
    %v259 = vpow.pop %v258
    %v260 = vadd.f32 %v259, 1.0
    %v261 = vrcp.pop %v260
    %v262 = vmul.f32 1.0, %v261
    %v263 = vtanh.pop %v256
    %v265 = vrot.slane %v193, 6
    %v267 = vmul.f32 %v262, %v265
    %269 = vrot.lane.b32.xlu0 %v263, 64
    %v270 = vpop.permute.xlu0 %269
    %v272 = vmul.f32 %v262, %v270
    %274 = vrot.lane.b32.xlu0 %v272, 32
    %v275 = vpop.permute.xlu0 %274
    %v277 = vadd.f32 %v267, %v275
    %v278 = vtanh.pop %v277
    %280 = vrot.lane.b32.xlu0 %v278, 64
    %v281 = vpop.permute.xlu0 %280
    %v283 = vmul.f32 %v262, %v281
    %285 = vrot.lane.b32.xlu0 %v283, 32
    %v286 = vpop.permute.xlu0 %285
    %s288 = scalar_lea.vmem [#allocation4], 2
    %vm289 = vcmask 257026
    %290 = vst.msk [vmem:[%s288 - $0x2] sm:$0xc] %vm289, %v286
    %v291 = vpack.c.bf16 %v283, %v283
    %v293 = vrot.slane %v291, 1
    %294 = vrot.lane.b32.xlu0 %v293, 32
    %v295 = vpop.permute.xlu0 %294
    %v297 = vsel %vm68, %v295, 0
    %299 = vmatprep.subr.bf16.mxu0 0
    %300 = vmatpush1.bf16.msra.mxu0 %v124
    %301 = vmatprep.subr.bf16.mxu0 0
    %302 = vmatpush1.bf16.msra.mxu0 %v125
    %303 = vmatprep.subr.bf16.mxu0 0
    %304 = vmatpush1.bf16.msra.mxu0 0
    %305 = vmatprep.subr.bf16.mxu0 0
    %306 = vmatpush1.bf16.msra.mxu0 0
    %307 = vmatprep.subr.bf16.mxu0 0
    %308 = vmatpush1.bf16.msra.mxu0 0
    %309 = vmatprep.subr.bf16.mxu0 0
    %310 = vmatpush1.bf16.msra.mxu0 0
    %311 = vmatprep.subr.bf16.mxu0 0
    %312 = vmatpush1.bf16.msra.mxu0 0
    %313 = vmatprep.subr.bf16.mxu0 0
    %314 = vmatpush1.bf16.msra.mxu0 0
    %315 = vmatprep.subr.bf16.mxu0 0
    %316 = vmatpush1.bf16.msra.mxu0 0
    %317 = vmatprep.subr.bf16.mxu0 0
    %318 = vmatpush1.bf16.msra.mxu0 0
    %319 = vmatprep.subr.bf16.mxu0 0
    %320 = vmatpush1.bf16.msra.mxu0 0
    %321 = vmatprep.subr.bf16.mxu0 0
    %322 = vmatpush1.bf16.msra.mxu0 0
    %323 = vmatprep.subr.bf16.mxu0 0
    %324 = vmatpush1.bf16.msra.mxu0 0
    %325 = vmatprep.subr.bf16.mxu0 0
    %326 = vmatpush1.bf16.msra.mxu0 0
    %327 = vmatprep.subr.bf16.mxu0 0
    %328 = vmatpush1.bf16.msra.mxu0 0
    %329 = vmatprep.subr.bf16.mxu0 0
    %330 = vmatpush1.bf16.msra.mxu0 0
    %331 = vmatprep.mubr.bf16.mxu0 0
    %332 = vmatmul.mubr.bf16.gmra.mrb[0].mxu0 %v297
    %v333 = vpop.f32.mrb[0].mxu0
    %v334 = vadd.f32 0.0, %v333
    %v335 = vpop.f32.mrb[0].mxu0
    %v336 = vpop.f32.mrb[0].mxu0
    %v337 = vpop.f32.mrb[0].mxu0
    %338 = vdwg.mxu0
    %v340 = vrot.slane %v334, 4
    %v342 = vadd.f32 %v107, %v340
    %v343 = vxor.u32 %v342, 2147483648
    %v344 = vmul.f32 %v343, 1.442695
    %v345 = vpow.pop %v344
    %v346 = vadd.f32 %v345, 1.0
    %v347 = vrcp.pop %v346
    %v348 = vmul.f32 1.0, %v347
    %v349 = vtanh.pop %v342
    %v351 = vrot.slane %v277, 6
    %v353 = vmul.f32 %v348, %v351
    %355 = vrot.lane.b32.xlu0 %v349, 64
    %v356 = vpop.permute.xlu0 %355
    %v358 = vmul.f32 %v348, %v356
    %360 = vrot.lane.b32.xlu0 %v358, 32
    %v361 = vpop.permute.xlu0 %360
    %v363 = vadd.f32 %v353, %v361
    %v364 = vtanh.pop %v363
    %366 = vrot.lane.b32.xlu0 %v364, 64
    %v367 = vpop.permute.xlu0 %366
    %v369 = vmul.f32 %v348, %v367
    %371 = vrot.lane.b32.xlu0 %v369, 32
    %v372 = vpop.permute.xlu0 %371
    %s374 = scalar_lea.vmem [#allocation4], 4
    %vm375 = vcmask 259076
    %376 = vst.msk [vmem:[%s374 - $0x4] sm:$0x30] %vm375, %v372
    %v377 = vpack.c.bf16 %v369, %v369
    %v379 = vrot.slane %v377, 2
    %380 = vrot.lane.b32.xlu0 %v379, 32
    %v381 = vpop.permute.xlu0 %380
    %v383 = vsel %vm68, %v381, 0
    %385 = vmatprep.subr.bf16.mxu0 0
    %386 = vmatpush1.bf16.msra.mxu0 %v124
    %387 = vmatprep.subr.bf16.mxu0 0
    %388 = vmatpush1.bf16.msra.mxu0 %v125
    %389 = vmatprep.subr.bf16.mxu0 0
    %390 = vmatpush1.bf16.msra.mxu0 0
    %391 = vmatprep.subr.bf16.mxu0 0
    %392 = vmatpush1.bf16.msra.mxu0 0
    %393 = vmatprep.subr.bf16.mxu0 0
    %394 = vmatpush1.bf16.msra.mxu0 0
    %395 = vmatprep.subr.bf16.mxu0 0
    %396 = vmatpush1.bf16.msra.mxu0 0
    %397 = vmatprep.subr.bf16.mxu0 0
    %398 = vmatpush1.bf16.msra.mxu0 0
    %399 = vmatprep.subr.bf16.mxu0 0
    %400 = vmatpush1.bf16.msra.mxu0 0
    %401 = vmatprep.subr.bf16.mxu0 0
    %402 = vmatpush1.bf16.msra.mxu0 0
    %403 = vmatprep.subr.bf16.mxu0 0
    %404 = vmatpush1.bf16.msra.mxu0 0
    %405 = vmatprep.subr.bf16.mxu0 0
    %406 = vmatpush1.bf16.msra.mxu0 0
    %407 = vmatprep.subr.bf16.mxu0 0
    %408 = vmatpush1.bf16.msra.mxu0 0
    %409 = vmatprep.subr.bf16.mxu0 0
    %410 = vmatpush1.bf16.msra.mxu0 0
    %411 = vmatprep.subr.bf16.mxu0 0
    %412 = vmatpush1.bf16.msra.mxu0 0
    %413 = vmatprep.subr.bf16.mxu0 0
    %414 = vmatpush1.bf16.msra.mxu0 0
    %415 = vmatprep.subr.bf16.mxu0 0
    %416 = vmatpush1.bf16.msra.mxu0 0
    %417 = vmatprep.mubr.bf16.mxu0 0
    %418 = vmatmul.mubr.bf16.gmra.mrb[0].mxu0 %v383
    %v419 = vpop.f32.mrb[0].mxu0
    %v420 = vadd.f32 0.0, %v419
    %v421 = vpop.f32.mrb[0].mxu0
    %v422 = vpop.f32.mrb[0].mxu0
    %v423 = vpop.f32.mrb[0].mxu0
    %424 = vdwg.mxu0
    %v426 = vrot.slane %v420, 2
    %v428 = vadd.f32 %v107, %v426
    %v429 = vxor.u32 %v428, 2147483648
    %v430 = vmul.f32 %v429, 1.442695
    %v431 = vpow.pop %v430
    %v432 = vadd.f32 %v431, 1.0
    %v433 = vrcp.pop %v432
    %v434 = vmul.f32 1.0, %v433
    %v435 = vtanh.pop %v428
    %v437 = vrot.slane %v363, 6
    %v439 = vmul.f32 %v434, %v437
    %441 = vrot.lane.b32.xlu0 %v435, 64
    %v442 = vpop.permute.xlu0 %441
    %v444 = vmul.f32 %v434, %v442
    %446 = vrot.lane.b32.xlu0 %v444, 32
    %v447 = vpop.permute.xlu0 %446
    %v449 = vadd.f32 %v439, %v447
    %v450 = vtanh.pop %v449
    %452 = vrot.lane.b32.xlu0 %v450, 64
    %v453 = vpop.permute.xlu0 %452
    %v455 = vmul.f32 %v434, %v453
    %457 = vrot.lane.b32.xlu0 %v455, 32
    %v458 = vpop.permute.xlu0 %457
    %s460 = scalar_lea.vmem [#allocation4], 6
    %vm461 = vcmask 261126
    %462 = vst.msk [vmem:[%s460 - $0x6] sm:$0xc0] %vm461, %v458
    %v463 = vpack.c.bf16 %v455, %v455
    %v465 = vrot.slane %v463, 3
    %466 = vrot.lane.b32.xlu0 %v465, 32
    %v467 = vpop.permute.xlu0 %466
    %v469 = vsel %vm68, %v467, 0
    %471 = vmatprep.subr.bf16.mxu0 0
    %472 = vmatpush1.bf16.msra.mxu0 %v124
    %473 = vmatprep.subr.bf16.mxu0 0
    %474 = vmatpush1.bf16.msra.mxu0 %v125
    %475 = vmatprep.subr.bf16.mxu0 0
    %476 = vmatpush1.bf16.msra.mxu0 0
    %477 = vmatprep.subr.bf16.mxu0 0
    %478 = vmatpush1.bf16.msra.mxu0 0
    %479 = vmatprep.subr.bf16.mxu0 0
    %480 = vmatpush1.bf16.msra.mxu0 0
    %481 = vmatprep.subr.bf16.mxu0 0
    %482 = vmatpush1.bf16.msra.mxu0 0
    %483 = vmatprep.subr.bf16.mxu0 0
    %484 = vmatpush1.bf16.msra.mxu0 0
    %485 = vmatprep.subr.bf16.mxu0 0
    %486 = vmatpush1.bf16.msra.mxu0 0
    %487 = vmatprep.subr.bf16.mxu0 0
    %488 = vmatpush1.bf16.msra.mxu0 0
    %489 = vmatprep.subr.bf16.mxu0 0
    %490 = vmatpush1.bf16.msra.mxu0 0
    %491 = vmatprep.subr.bf16.mxu0 0
    %492 = vmatpush1.bf16.msra.mxu0 0
    %493 = vmatprep.subr.bf16.mxu0 0
    %494 = vmatpush1.bf16.msra.mxu0 0
    %495 = vmatprep.subr.bf16.mxu0 0
    %496 = vmatpush1.bf16.msra.mxu0 0
    %497 = vmatprep.subr.bf16.mxu0 0
    %498 = vmatpush1.bf16.msra.mxu0 0
    %499 = vmatprep.subr.bf16.mxu0 0
    %500 = vmatpush1.bf16.msra.mxu0 0
    %501 = vmatprep.subr.bf16.mxu0 0
    %502 = vmatpush1.bf16.msra.mxu0 0
    %503 = vmatprep.mubr.bf16.mxu0 0
    %504 = vmatmul.mubr.bf16.gmra.mrb[0].mxu0 %v469
    %v505 = vpop.f32.mrb[0].mxu0
    %v506 = vadd.f32 0.0, %v505
    %v507 = vpop.f32.mrb[0].mxu0
    %v508 = vpop.f32.mrb[0].mxu0
    %v509 = vpop.f32.mrb[0].mxu0
    %510 = vdwg.mxu0
    %v511 = vadd.f32 %v110, %v506
    %v512 = vxor.u32 %v511, 2147483648
    %v513 = vmul.f32 %v512, 1.442695
    %v514 = vpow.pop %v513
    %v515 = vadd.f32 %v514, 1.0
    %v516 = vrcp.pop %v515
    %v517 = vmul.f32 1.0, %v516
    %v518 = vtanh.pop %v511
    %v520 = vrot.slane %v449, 6
    %v522 = vmul.f32 %v517, %v520
    %524 = vrot.lane.b32.xlu0 %v518, 64
    %v525 = vpop.permute.xlu0 %524
    %v527 = vmul.f32 %v517, %v525
    %529 = vrot.lane.b32.xlu0 %v527, 32
    %v530 = vpop.permute.xlu0 %529
    %v532 = vadd.f32 %v522, %v530
    %v533 = vtanh.pop %v532
    %535 = vrot.lane.b32.xlu0 %v533, 64
    %v536 = vpop.permute.xlu0 %535
    %v538 = vmul.f32 %v517, %v536
    %540 = vrot.lane.b32.xlu0 %v538, 32
    %v541 = vpop.permute.xlu0 %540
    %s543 = scalar_lea.vmem [#allocation4], 8
    %544 = vst.msk [vmem:[%s543] sm:$0x3] %vm204, %v541
    %v545 = vpack.c.bf16 %v538, %v538
    %547 = vrot.lane.b32.xlu0 %v545, 32
    %v548 = vpop.permute.xlu0 %547
    %v550 = vsel %vm68, %v548, 0
    %552 = vmatprep.subr.bf16.mxu0 0
    %553 = vmatpush1.bf16.msra.mxu0 %v124
    %554 = vmatprep.subr.bf16.mxu0 0
    %555 = vmatpush1.bf16.msra.mxu0 %v125
    %556 = vmatprep.subr.bf16.mxu0 0
    %557 = vmatpush1.bf16.msra.mxu0 0
    %558 = vmatprep.subr.bf16.mxu0 0
    %559 = vmatpush1.bf16.msra.mxu0 0
    %560 = vmatprep.subr.bf16.mxu0 0
    %561 = vmatpush1.bf16.msra.mxu0 0
    %562 = vmatprep.subr.bf16.mxu0 0
    %563 = vmatpush1.bf16.msra.mxu0 0
    %564 = vmatprep.subr.bf16.mxu0 0
    %565 = vmatpush1.bf16.msra.mxu0 0
    %566 = vmatprep.subr.bf16.mxu0 0
    %567 = vmatpush1.bf16.msra.mxu0 0
    %568 = vmatprep.subr.bf16.mxu0 0
    %569 = vmatpush1.bf16.msra.mxu0 0
    %570 = vmatprep.subr.bf16.mxu0 0
    %571 = vmatpush1.bf16.msra.mxu0 0
    %572 = vmatprep.subr.bf16.mxu0 0
    %573 = vmatpush1.bf16.msra.mxu0 0
    %574 = vmatprep.subr.bf16.mxu0 0
    %575 = vmatpush1.bf16.msra.mxu0 0
    %576 = vmatprep.subr.bf16.mxu0 0
    %577 = vmatpush1.bf16.msra.mxu0 0
    %578 = vmatprep.subr.bf16.mxu0 0
    %579 = vmatpush1.bf16.msra.mxu0 0
    %580 = vmatprep.subr.bf16.mxu0 0
    %581 = vmatpush1.bf16.msra.mxu0 0
    %582 = vmatprep.subr.bf16.mxu0 0
    %583 = vmatpush1.bf16.msra.mxu0 0
    %584 = vmatprep.mubr.bf16.mxu0 0
    %585 = vmatmul.mubr.bf16.gmra.mrb[0].mxu0 %v550
    %v586 = vpop.f32.mrb[0].mxu0
    %v587 = vadd.f32 0.0, %v586
    %v588 = vpop.f32.mrb[0].mxu0
    %v589 = vpop.f32.mrb[0].mxu0
    %v590 = vpop.f32.mrb[0].mxu0
    %591 = vdwg.mxu0
    %v593 = vrot.slane %v587, 6
    %v595 = vadd.f32 %v110, %v593
    %v596 = vxor.u32 %v595, 2147483648
    %v597 = vmul.f32 %v596, 1.442695
    %v598 = vpow.pop %v597
    %v599 = vadd.f32 %v598, 1.0
    %v600 = vrcp.pop %v599
    %v601 = vmul.f32 1.0, %v600
    %v602 = vtanh.pop %v595
    %v604 = vrot.slane %v532, 6
    %v606 = vmul.f32 %v601, %v604
    %608 = vrot.lane.b32.xlu0 %v602, 64
    %v609 = vpop.permute.xlu0 %608
    %v611 = vmul.f32 %v601, %v609
    %613 = vrot.lane.b32.xlu0 %v611, 32
    %v614 = vpop.permute.xlu0 %613
    %v616 = vadd.f32 %v606, %v614
    %v617 = vtanh.pop %v616
    %619 = vrot.lane.b32.xlu0 %v617, 64
    %v620 = vpop.permute.xlu0 %619
    %v622 = vmul.f32 %v601, %v620
    %624 = vrot.lane.b32.xlu0 %v622, 32
    %v625 = vpop.permute.xlu0 %624
    %s627 = scalar_lea.vmem [#allocation4], 10
    %628 = vst.msk [vmem:[%s627 - $0x2] sm:$0xc] %vm289, %v625
    %v629 = vpack.c.bf16 %v622, %v622
    %v631 = vrot.slane %v629, 1
    %632 = vrot.lane.b32.xlu0 %v631, 32
    %v633 = vpop.permute.xlu0 %632
    %v635 = vsel %vm68, %v633, 0
    %637 = vmatprep.subr.bf16.mxu0 0
    %638 = vmatpush1.bf16.msra.mxu0 %v124
    %639 = vmatprep.subr.bf16.mxu0 0
    %640 = vmatpush1.bf16.msra.mxu0 %v125
    %641 = vmatprep.subr.bf16.mxu0 0
    %642 = vmatpush1.bf16.msra.mxu0 0
    %643 = vmatprep.subr.bf16.mxu0 0
    %644 = vmatpush1.bf16.msra.mxu0 0
    %645 = vmatprep.subr.bf16.mxu0 0
    %646 = vmatpush1.bf16.msra.mxu0 0
    %647 = vmatprep.subr.bf16.mxu0 0
    %648 = vmatpush1.bf16.msra.mxu0 0
    %649 = vmatprep.subr.bf16.mxu0 0
    %650 = vmatpush1.bf16.msra.mxu0 0
    %651 = vmatprep.subr.bf16.mxu0 0
    %652 = vmatpush1.bf16.msra.mxu0 0
    %653 = vmatprep.subr.bf16.mxu0 0
    %654 = vmatpush1.bf16.msra.mxu0 0
    %655 = vmatprep.subr.bf16.mxu0 0
    %656 = vmatpush1.bf16.msra.mxu0 0
    %657 = vmatprep.subr.bf16.mxu0 0
    %658 = vmatpush1.bf16.msra.mxu0 0
    %659 = vmatprep.subr.bf16.mxu0 0
    %660 = vmatpush1.bf16.msra.mxu0 0
    %661 = vmatprep.subr.bf16.mxu0 0
    %662 = vmatpush1.bf16.msra.mxu0 0
    %663 = vmatprep.subr.bf16.mxu0 0
    %664 = vmatpush1.bf16.msra.mxu0 0
    %665 = vmatprep.subr.bf16.mxu0 0
    %666 = vmatpush1.bf16.msra.mxu0 0
    %667 = vmatprep.subr.bf16.mxu0 0
    %668 = vmatpush1.bf16.msra.mxu0 0
    %669 = vmatprep.mubr.bf16.mxu0 0
    %670 = vmatmul.mubr.bf16.gmra.mrb[0].mxu0 %v635
    %v671 = vpop.f32.mrb[0].mxu0
    %v672 = vadd.f32 0.0, %v671
    %v673 = vpop.f32.mrb[0].mxu0
    %v674 = vpop.f32.mrb[0].mxu0
    %v675 = vpop.f32.mrb[0].mxu0
    %676 = vdwg.mxu0
    %v678 = vrot.slane %v672, 4
    %v680 = vadd.f32 %v110, %v678
    %v681 = vxor.u32 %v680, 2147483648
    %v682 = vmul.f32 %v681, 1.442695
    %v683 = vpow.pop %v682
    %v684 = vadd.f32 %v683, 1.0
    %v685 = vrcp.pop %v684
    %v686 = vmul.f32 1.0, %v685
    %v687 = vtanh.pop %v680
    %v689 = vrot.slane %v616, 6
    %v691 = vmul.f32 %v686, %v689
    %693 = vrot.lane.b32.xlu0 %v687, 64
    %v694 = vpop.permute.xlu0 %693
    %v696 = vmul.f32 %v686, %v694
    %698 = vrot.lane.b32.xlu0 %v696, 32
    %v699 = vpop.permute.xlu0 %698
    %v701 = vadd.f32 %v691, %v699
    %v702 = vtanh.pop %v701
    %704 = vrot.lane.b32.xlu0 %v702, 64
    %v705 = vpop.permute.xlu0 %704
    %v707 = vmul.f32 %v686, %v705
    %709 = vrot.lane.b32.xlu0 %v707, 32
    %v710 = vpop.permute.xlu0 %709
    %s712 = scalar_lea.vmem [#allocation4], 12
    %713 = vst.msk [vmem:[%s712 - $0x4] sm:$0x30] %vm375, %v710
    %v714 = vpack.c.bf16 %v707, %v707
    %v716 = vrot.slane %v714, 2
    %717 = vrot.lane.b32.xlu0 %v716, 32
    %v718 = vpop.permute.xlu0 %717
    %v720 = vsel %vm68, %v718, 0
    %722 = vmatprep.subr.bf16.mxu0 0
    %723 = vmatpush1.bf16.msra.mxu0 %v124
    %724 = vmatprep.subr.bf16.mxu0 0
    %725 = vmatpush1.bf16.msra.mxu0 %v125
    %726 = vmatprep.subr.bf16.mxu0 0
    %727 = vmatpush1.bf16.msra.mxu0 0
    %728 = vmatprep.subr.bf16.mxu0 0
    %729 = vmatpush1.bf16.msra.mxu0 0
    %730 = vmatprep.subr.bf16.mxu0 0
    %731 = vmatpush1.bf16.msra.mxu0 0
    %732 = vmatprep.subr.bf16.mxu0 0
    %733 = vmatpush1.bf16.msra.mxu0 0
    %734 = vmatprep.subr.bf16.mxu0 0
    %735 = vmatpush1.bf16.msra.mxu0 0
    %736 = vmatprep.subr.bf16.mxu0 0
    %737 = vmatpush1.bf16.msra.mxu0 0
    %738 = vmatprep.subr.bf16.mxu0 0
    %739 = vmatpush1.bf16.msra.mxu0 0
    %740 = vmatprep.subr.bf16.mxu0 0
    %741 = vmatpush1.bf16.msra.mxu0 0
    %742 = vmatprep.subr.bf16.mxu0 0
    %743 = vmatpush1.bf16.msra.mxu0 0
    %744 = vmatprep.subr.bf16.mxu0 0
    %745 = vmatpush1.bf16.msra.mxu0 0
    %746 = vmatprep.subr.bf16.mxu0 0
    %747 = vmatpush1.bf16.msra.mxu0 0
    %748 = vmatprep.subr.bf16.mxu0 0
    %749 = vmatpush1.bf16.msra.mxu0 0
    %750 = vmatprep.subr.bf16.mxu0 0
    %751 = vmatpush1.bf16.msra.mxu0 0
    %752 = vmatprep.subr.bf16.mxu0 0
    %753 = vmatpush1.bf16.msra.mxu0 0
    %754 = vmatprep.mubr.bf16.mxu0 0
    %755 = vmatmul.mubr.bf16.gmra.mrb[0].mxu0 %v720
    %v756 = vpop.f32.mrb[0].mxu0
    %v757 = vadd.f32 0.0, %v756
    %v758 = vpop.f32.mrb[0].mxu0
    %v759 = vpop.f32.mrb[0].mxu0
    %v760 = vpop.f32.mrb[0].mxu0
    %761 = vdwg.mxu0
    %v763 = vrot.slane %v757, 2
    %v765 = vadd.f32 %v110, %v763
    %v766 = vxor.u32 %v765, 2147483648
    %v767 = vmul.f32 %v766, 1.442695
    %v768 = vpow.pop %v767
    %v769 = vadd.f32 %v768, 1.0
    %v770 = vrcp.pop %v769
    %v771 = vmul.f32 1.0, %v770
    %v772 = vtanh.pop %v765
    %v774 = vrot.slane %v701, 6
    %v776 = vmul.f32 %v771, %v774
    %778 = vrot.lane.b32.xlu0 %v772, 64
    %v779 = vpop.permute.xlu0 %778
    %v781 = vmul.f32 %v771, %v779
    %783 = vrot.lane.b32.xlu0 %v781, 32
    %v784 = vpop.permute.xlu0 %783
    %v786 = vadd.f32 %v776, %v784
    %v787 = vtanh.pop %v786
    %789 = vrot.lane.b32.xlu0 %v787, 64
    %v790 = vpop.permute.xlu0 %789
    %v792 = vmul.f32 %v771, %v790
    %794 = vrot.lane.b32.xlu0 %v792, 32
    %v795 = vpop.permute.xlu0 %794
    %s797 = scalar_lea.vmem [#allocation4], 14
    %798 = vst.msk [vmem:[%s797 - $0x6] sm:$0xc0] %vm461, %v795
    %799 = vst.msk [vmem:[#allocation2 - $0x6] sm:$0xc0] %vm461, %v795
    %801 = vrot.lane.b32.xlu0 %v786, 96
    %v802 = vpop.permute.xlu0 %801
    %804 = vst.msk [vmem:[#allocation3 - $0x6] sm:$0xc0] %vm461, %v802
    %v805 = vld [vmem:[%s4] sm:$0x1]
    %v806 = vld [vmem:[%s5] sm:$0x1]
    %v807 = vld [vmem:[%s6] sm:$0x1]
    %v808 = vld [vmem:[%s7] sm:$0x1]
    %v809 = vld [vmem:[#allocation4] sm:$0x3]
    %v810 = vsel %vm204, %v809, 0.0
    %811 = vadd.xlane.f32.xlu0 %v810
    %v812 = vpop.xlane.xlu0 %811
    %v813 = vrcp.pop 32.0
    %v814 = vmul.f32 %v812, %v813
    %v815 = vsub.f32 %v809, %v814
    %v816 = vmul.f32 %v815, %v815
    %v817 = vsel %vm204, %v816, 0.0
    %818 = vadd.xlane.f32.xlu0 %v817
    %v819 = vpop.xlane.xlu0 %818
    %v820 = vmul.f32 %v819, %v813
    %v821 = vadd.f32 %v820, 1e-05
    %v822 = vrsqrt.pop %v821
    %v823 = vmul.f32 %v815, %v822
    %v825 = vlaneseq
    %v826 = vshrl.u32 %v825, 7
    %v827 = vsub.s32 0, %v826
    %v828 = vrot.slane %v805, %v827
    %v830 = vmul.f32 %v823, %v828
    %v832 = vlaneseq
    %v833 = vshrl.u32 %v832, 7
    %v834 = vsub.s32 0, %v833
    %v835 = vrot.slane %v806, %v834
    %v837 = vadd.f32 %v830, %v835
    %v838 = vadd.f32 %v837, %v38
    %v839 = vsel %vm204, %v838, 0.0
    %840 = vadd.xlane.f32.xlu0 %v839
    %v841 = vpop.xlane.xlu0 %840
    %v842 = vmul.f32 %v841, %v813
    %v843 = vsub.f32 %v838, %v842
    %v844 = vmul.f32 %v843, %v843
    %v845 = vsel %vm204, %v844, 0.0
    %846 = vadd.xlane.f32.xlu0 %v845
    %v847 = vpop.xlane.xlu0 %846
    %v848 = vmul.f32 %v847, %v813
    %v849 = vadd.f32 %v848, 1e-05
    %v850 = vrsqrt.pop %v849
    %v851 = vmul.f32 %v843, %v850
    %v853 = vlaneseq
    %v854 = vshrl.u32 %v853, 7
    %v855 = vsub.s32 0, %v854
    %v856 = vrot.slane %v807, %v855
    %v858 = vmul.f32 %v851, %v856
    %v860 = vlaneseq
    %v861 = vshrl.u32 %v860, 7
    %v862 = vsub.s32 0, %v861
    %v863 = vrot.slane %v808, %v862
    %v865 = vadd.f32 %v858, %v863
    %v868 = vunpack.c.l.s4 1966171168
    %v869 = vunpack.c.0.s8 %v868
    %v870 = vlaneseq
    %v871 = vshrl.u32 %v870, 7
    %v872 = vsub.s32 %v869, %v871
    %v873 = vrot.slane %v865, %v872
    %v874 = vcombine.high %v873, %v873
    %v876 = vunpack.c.l.s4 1966171168
    %v877 = vunpack.c.0.s8 %v876
    %v878 = vlaneseq
    %v879 = vshrl.u32 %v878, 7
    %v880 = vsub.s32 %v877, %v879
    %v881 = vrot.slane %v873, %v880
    %v883 = vunpack.c.l.s4 1966171168
    %v884 = vunpack.c.0.s8 %v883
    %v885 = vlaneseq
    %v886 = vshrl.u32 %v885, 7
    %v887 = vsub.s32 %v884, %v886
    %v888 = vrot.slane %v874, %v887
    %vm891 = vcmask 253952
    %892 = vst.msk [vmem:[#allocation5] sm:$0x1] %vm891, %v881
    %893 = vst.msk [vmem:[#allocation5 + $0x8] sm:$0x1] %vm891, %v888
    %v894 = vld [vmem:[%s288] sm:$0x3]
    %v895 = vsel %vm204, %v894, 0.0
    %896 = vadd.xlane.f32.xlu0 %v895
    %v897 = vpop.xlane.xlu0 %896
    %v898 = vmul.f32 %v897, %v813
    %v899 = vsub.f32 %v894, %v898
    %v900 = vmul.f32 %v899, %v899
    %v901 = vsel %vm204, %v900, 0.0
    %902 = vadd.xlane.f32.xlu0 %v901
    %v903 = vpop.xlane.xlu0 %902
    %v904 = vmul.f32 %v903, %v813
    %v905 = vadd.f32 %v904, 1e-05
    %v906 = vrsqrt.pop %v905
    %v907 = vmul.f32 %v899, %v906
    %v908 = vmul.f32 %v907, %v828
    %v909 = vadd.f32 %v908, %v835
    %v911 = vrot.slane %v38, 2
    %v913 = vadd.f32 %v909, %v911
    %v914 = vsel %vm204, %v913, 0.0
    %915 = vadd.xlane.f32.xlu0 %v914
    %v916 = vpop.xlane.xlu0 %915
    %v917 = vmul.f32 %v916, %v813
    %v918 = vsub.f32 %v913, %v917
    %v919 = vmul.f32 %v918, %v918
    %v920 = vsel %vm204, %v919, 0.0
    %921 = vadd.xlane.f32.xlu0 %v920
    %v922 = vpop.xlane.xlu0 %921
    %v923 = vmul.f32 %v922, %v813
    %v924 = vadd.f32 %v923, 1e-05
    %v925 = vrsqrt.pop %v924
    %v926 = vmul.f32 %v918, %v925
    %v927 = vmul.f32 %v926, %v856
    %v928 = vadd.f32 %v927, %v863
    %v931 = vunpack.c.l.s4 1966171168
    %v932 = vunpack.c.0.s8 %v931
    %v933 = vlaneseq
    %v934 = vshrl.u32 %v933, 7
    %v935 = vsub.s32 %v932, %v934
    %v936 = vrot.slane %v928, %v935
    %v937 = vcombine.high %v936, %v936
    %v939 = vunpack.c.l.s4 1966171168
    %v940 = vunpack.c.0.s8 %v939
    %v941 = vlaneseq
    %v942 = vshrl.u32 %v941, 7
    %v943 = vsub.s32 %v940, %v942
    %v944 = vrot.slane %v936, %v943
    %v946 = vunpack.c.l.s4 1966171168
    %v947 = vunpack.c.0.s8 %v946
    %v948 = vlaneseq
    %v949 = vshrl.u32 %v948, 7
    %v950 = vsub.s32 %v947, %v949
    %v951 = vrot.slane %v937, %v950
    %954 = vst.msk [vmem:[#allocation5 + $0x1] sm:$0x1] %vm891, %v944
    %955 = vst.msk [vmem:[#allocation5 + $0x9] sm:$0x1] %vm891, %v951
    %v956 = vld [vmem:[%s374] sm:$0x3]
    %v957 = vsel %vm204, %v956, 0.0
    %958 = vadd.xlane.f32.xlu0 %v957
    %v959 = vpop.xlane.xlu0 %958
    %v960 = vmul.f32 %v959, %v813
    %v961 = vsub.f32 %v956, %v960
    %v962 = vmul.f32 %v961, %v961
    %v963 = vsel %vm204, %v962, 0.0
    %964 = vadd.xlane.f32.xlu0 %v963
    %v965 = vpop.xlane.xlu0 %964
    %v966 = vmul.f32 %v965, %v813
    %v967 = vadd.f32 %v966, 1e-05
    %v968 = vrsqrt.pop %v967
    %v969 = vmul.f32 %v961, %v968
    %v970 = vmul.f32 %v969, %v828
    %v971 = vadd.f32 %v970, %v835
    %v972 = vrot.slane %v38, 4
    %v974 = vadd.f32 %v971, %v972
    %v975 = vsel %vm204, %v974, 0.0
    %976 = vadd.xlane.f32.xlu0 %v975
    %v977 = vpop.xlane.xlu0 %976
    %v978 = vmul.f32 %v977, %v813
    %v979 = vsub.f32 %v974, %v978
    %v980 = vmul.f32 %v979, %v979
    %v981 = vsel %vm204, %v980, 0.0
    %982 = vadd.xlane.f32.xlu0 %v981
    %v983 = vpop.xlane.xlu0 %982
    %v984 = vmul.f32 %v983, %v813
    %v985 = vadd.f32 %v984, 1e-05
    %v986 = vrsqrt.pop %v985
    %v987 = vmul.f32 %v979, %v986
    %v988 = vmul.f32 %v987, %v856
    %v989 = vadd.f32 %v988, %v863
    %v992 = vunpack.c.l.s4 1966171168
    %v993 = vunpack.c.0.s8 %v992
    %v994 = vlaneseq
    %v995 = vshrl.u32 %v994, 7
    %v996 = vsub.s32 %v993, %v995
    %v997 = vrot.slane %v989, %v996
    %v998 = vcombine.high %v997, %v997
    %v1000 = vunpack.c.l.s4 1966171168
    %v1001 = vunpack.c.0.s8 %v1000
    %v1002 = vlaneseq
    %v1003 = vshrl.u32 %v1002, 7
    %v1004 = vsub.s32 %v1001, %v1003
    %v1005 = vrot.slane %v997, %v1004
    %v1007 = vunpack.c.l.s4 1966171168
    %v1008 = vunpack.c.0.s8 %v1007
    %v1009 = vlaneseq
    %v1010 = vshrl.u32 %v1009, 7
    %v1011 = vsub.s32 %v1008, %v1010
    %v1012 = vrot.slane %v998, %v1011
    %1015 = vst.msk [vmem:[#allocation5 + $0x2] sm:$0x1] %vm891, %v1005
    %1016 = vst.msk [vmem:[#allocation5 + $0xa] sm:$0x1] %vm891, %v1012
    %v1017 = vld [vmem:[%s460] sm:$0x3]
    %v1018 = vsel %vm204, %v1017, 0.0
    %1019 = vadd.xlane.f32.xlu0 %v1018
    %v1020 = vpop.xlane.xlu0 %1019
    %v1021 = vmul.f32 %v1020, %v813
    %v1022 = vsub.f32 %v1017, %v1021
    %v1023 = vmul.f32 %v1022, %v1022
    %v1024 = vsel %vm204, %v1023, 0.0
    %1025 = vadd.xlane.f32.xlu0 %v1024
    %v1026 = vpop.xlane.xlu0 %1025
    %v1027 = vmul.f32 %v1026, %v813
    %v1028 = vadd.f32 %v1027, 1e-05
    %v1029 = vrsqrt.pop %v1028
    %v1030 = vmul.f32 %v1022, %v1029
    %v1031 = vmul.f32 %v1030, %v828
    %v1032 = vadd.f32 %v1031, %v835
    %v1033 = vrot.slane %v38, 6
    %v1035 = vadd.f32 %v1032, %v1033
    %v1036 = vsel %vm204, %v1035, 0.0
    %1037 = vadd.xlane.f32.xlu0 %v1036
    %v1038 = vpop.xlane.xlu0 %1037
    %v1039 = vmul.f32 %v1038, %v813
    %v1040 = vsub.f32 %v1035, %v1039
    %v1041 = vmul.f32 %v1040, %v1040
    %v1042 = vsel %vm204, %v1041, 0.0
    %1043 = vadd.xlane.f32.xlu0 %v1042
    %v1044 = vpop.xlane.xlu0 %1043
    %v1045 = vmul.f32 %v1044, %v813
    %v1046 = vadd.f32 %v1045, 1e-05
    %v1047 = vrsqrt.pop %v1046
    %v1048 = vmul.f32 %v1040, %v1047
    %v1049 = vmul.f32 %v1048, %v856
    %v1050 = vadd.f32 %v1049, %v863
    %v1053 = vunpack.c.l.s4 1966171168
    %v1054 = vunpack.c.0.s8 %v1053
    %v1055 = vlaneseq
    %v1056 = vshrl.u32 %v1055, 7
    %v1057 = vsub.s32 %v1054, %v1056
    %v1058 = vrot.slane %v1050, %v1057
    %v1059 = vcombine.high %v1058, %v1058
    %v1061 = vunpack.c.l.s4 1966171168
    %v1062 = vunpack.c.0.s8 %v1061
    %v1063 = vlaneseq
    %v1064 = vshrl.u32 %v1063, 7
    %v1065 = vsub.s32 %v1062, %v1064
    %v1066 = vrot.slane %v1058, %v1065
    %v1068 = vunpack.c.l.s4 1966171168
    %v1069 = vunpack.c.0.s8 %v1068
    %v1070 = vlaneseq
    %v1071 = vshrl.u32 %v1070, 7
    %v1072 = vsub.s32 %v1069, %v1071
    %v1073 = vrot.slane %v1059, %v1072
    %1076 = vst.msk [vmem:[#allocation5 + $0x3] sm:$0x1] %vm891, %v1066
    %1077 = vst.msk [vmem:[#allocation5 + $0xb] sm:$0x1] %vm891, %v1073
    %v1078 = vld [vmem:[%s543] sm:$0x3]
    %v1079 = vsel %vm204, %v1078, 0.0
    %1080 = vadd.xlane.f32.xlu0 %v1079
    %v1081 = vpop.xlane.xlu0 %1080
    %v1082 = vmul.f32 %v1081, %v813
    %v1083 = vsub.f32 %v1078, %v1082
    %v1084 = vmul.f32 %v1083, %v1083
    %v1085 = vsel %vm204, %v1084, 0.0
    %1086 = vadd.xlane.f32.xlu0 %v1085
    %v1087 = vpop.xlane.xlu0 %1086
    %v1088 = vmul.f32 %v1087, %v813
    %v1089 = vadd.f32 %v1088, 1e-05
    %v1090 = vrsqrt.pop %v1089
    %v1091 = vmul.f32 %v1083, %v1090
    %v1092 = vmul.f32 %v1091, %v828
    %v1093 = vadd.f32 %v1092, %v835
    %v1094 = vadd.f32 %v1093, %v39
    %v1095 = vsel %vm204, %v1094, 0.0
    %1096 = vadd.xlane.f32.xlu0 %v1095
    %v1097 = vpop.xlane.xlu0 %1096
    %v1098 = vmul.f32 %v1097, %v813
    %v1099 = vsub.f32 %v1094, %v1098
    %v1100 = vmul.f32 %v1099, %v1099
    %v1101 = vsel %vm204, %v1100, 0.0
    %1102 = vadd.xlane.f32.xlu0 %v1101
    %v1103 = vpop.xlane.xlu0 %1102
    %v1104 = vmul.f32 %v1103, %v813
    %v1105 = vadd.f32 %v1104, 1e-05
    %v1106 = vrsqrt.pop %v1105
    %v1107 = vmul.f32 %v1099, %v1106
    %v1108 = vmul.f32 %v1107, %v856
    %v1109 = vadd.f32 %v1108, %v863
    %v1112 = vunpack.c.l.s4 1966171168
    %v1113 = vunpack.c.0.s8 %v1112
    %v1114 = vlaneseq
    %v1115 = vshrl.u32 %v1114, 7
    %v1116 = vsub.s32 %v1113, %v1115
    %v1117 = vrot.slane %v1109, %v1116
    %v1118 = vcombine.high %v1117, %v1117
    %v1120 = vunpack.c.l.s4 1966171168
    %v1121 = vunpack.c.0.s8 %v1120
    %v1122 = vlaneseq
    %v1123 = vshrl.u32 %v1122, 7
    %v1124 = vsub.s32 %v1121, %v1123
    %v1125 = vrot.slane %v1117, %v1124
    %v1127 = vunpack.c.l.s4 1966171168
    %v1128 = vunpack.c.0.s8 %v1127
    %v1129 = vlaneseq
    %v1130 = vshrl.u32 %v1129, 7
    %v1131 = vsub.s32 %v1128, %v1130
    %v1132 = vrot.slane %v1118, %v1131
    %1135 = vst.msk [vmem:[#allocation5 + $0x4] sm:$0x1] %vm891, %v1125
    %1136 = vst.msk [vmem:[#allocation5 + $0xc] sm:$0x1] %vm891, %v1132
    %v1137 = vld [vmem:[%s627] sm:$0x3]
    %v1138 = vsel %vm204, %v1137, 0.0
    %1139 = vadd.xlane.f32.xlu0 %v1138
    %v1140 = vpop.xlane.xlu0 %1139
    %v1141 = vmul.f32 %v1140, %v813
    %v1142 = vsub.f32 %v1137, %v1141
    %v1143 = vmul.f32 %v1142, %v1142
    %v1144 = vsel %vm204, %v1143, 0.0
    %1145 = vadd.xlane.f32.xlu0 %v1144
    %v1146 = vpop.xlane.xlu0 %1145
    %v1147 = vmul.f32 %v1146, %v813
    %v1148 = vadd.f32 %v1147, 1e-05
    %v1149 = vrsqrt.pop %v1148
    %v1150 = vmul.f32 %v1142, %v1149
    %v1151 = vmul.f32 %v1150, %v828
    %v1152 = vadd.f32 %v1151, %v835
    %v1154 = vrot.slane %v39, 2
    %v1156 = vadd.f32 %v1152, %v1154
    %v1157 = vsel %vm204, %v1156, 0.0
    %1158 = vadd.xlane.f32.xlu0 %v1157
    %v1159 = vpop.xlane.xlu0 %1158
    %v1160 = vmul.f32 %v1159, %v813
    %v1161 = vsub.f32 %v1156, %v1160
    %v1162 = vmul.f32 %v1161, %v1161
    %v1163 = vsel %vm204, %v1162, 0.0
    %1164 = vadd.xlane.f32.xlu0 %v1163
    %v1165 = vpop.xlane.xlu0 %1164
    %v1166 = vmul.f32 %v1165, %v813
    %v1167 = vadd.f32 %v1166, 1e-05
    %v1168 = vrsqrt.pop %v1167
    %v1169 = vmul.f32 %v1161, %v1168
    %v1170 = vmul.f32 %v1169, %v856
    %v1171 = vadd.f32 %v1170, %v863
    %v1174 = vunpack.c.l.s4 1966171168
    %v1175 = vunpack.c.0.s8 %v1174
    %v1176 = vlaneseq
    %v1177 = vshrl.u32 %v1176, 7
    %v1178 = vsub.s32 %v1175, %v1177
    %v1179 = vrot.slane %v1171, %v1178
    %v1180 = vcombine.high %v1179, %v1179
    %v1182 = vunpack.c.l.s4 1966171168
    %v1183 = vunpack.c.0.s8 %v1182
    %v1184 = vlaneseq
    %v1185 = vshrl.u32 %v1184, 7
    %v1186 = vsub.s32 %v1183, %v1185
    %v1187 = vrot.slane %v1179, %v1186
    %v1189 = vunpack.c.l.s4 1966171168
    %v1190 = vunpack.c.0.s8 %v1189
    %v1191 = vlaneseq
    %v1192 = vshrl.u32 %v1191, 7
    %v1193 = vsub.s32 %v1190, %v1192
    %v1194 = vrot.slane %v1180, %v1193
    %1197 = vst.msk [vmem:[#allocation5 + $0x5] sm:$0x1] %vm891, %v1187
    %1198 = vst.msk [vmem:[#allocation5 + $0xd] sm:$0x1] %vm891, %v1194
    %v1199 = vld [vmem:[%s712] sm:$0x3]
    %v1200 = vsel %vm204, %v1199, 0.0
    %1201 = vadd.xlane.f32.xlu0 %v1200
    %v1202 = vpop.xlane.xlu0 %1201
    %v1203 = vmul.f32 %v1202, %v813
    %v1204 = vsub.f32 %v1199, %v1203
    %v1205 = vmul.f32 %v1204, %v1204
    %v1206 = vsel %vm204, %v1205, 0.0
    %1207 = vadd.xlane.f32.xlu0 %v1206
    %v1208 = vpop.xlane.xlu0 %1207
    %v1209 = vmul.f32 %v1208, %v813
    %v1210 = vadd.f32 %v1209, 1e-05
    %v1211 = vrsqrt.pop %v1210
    %v1212 = vmul.f32 %v1204, %v1211
    %v1213 = vmul.f32 %v1212, %v828
    %v1214 = vadd.f32 %v1213, %v835
    %v1215 = vrot.slane %v39, 4
    %v1217 = vadd.f32 %v1214, %v1215
    %v1218 = vsel %vm204, %v1217, 0.0
    %1219 = vadd.xlane.f32.xlu0 %v1218
    %v1220 = vpop.xlane.xlu0 %1219
    %v1221 = vmul.f32 %v1220, %v813
    %v1222 = vsub.f32 %v1217, %v1221
    %v1223 = vmul.f32 %v1222, %v1222
    %v1224 = vsel %vm204, %v1223, 0.0
    %1225 = vadd.xlane.f32.xlu0 %v1224
    %v1226 = vpop.xlane.xlu0 %1225
    %v1227 = vmul.f32 %v1226, %v813
    %v1228 = vadd.f32 %v1227, 1e-05
    %v1229 = vrsqrt.pop %v1228
    %v1230 = vmul.f32 %v1222, %v1229
    %v1231 = vmul.f32 %v1230, %v856
    %v1232 = vadd.f32 %v1231, %v863
    %v1235 = vunpack.c.l.s4 1966171168
    %v1236 = vunpack.c.0.s8 %v1235
    %v1237 = vlaneseq
    %v1238 = vshrl.u32 %v1237, 7
    %v1239 = vsub.s32 %v1236, %v1238
    %v1240 = vrot.slane %v1232, %v1239
    %v1241 = vcombine.high %v1240, %v1240
    %v1243 = vunpack.c.l.s4 1966171168
    %v1244 = vunpack.c.0.s8 %v1243
    %v1245 = vlaneseq
    %v1246 = vshrl.u32 %v1245, 7
    %v1247 = vsub.s32 %v1244, %v1246
    %v1248 = vrot.slane %v1240, %v1247
    %v1250 = vunpack.c.l.s4 1966171168
    %v1251 = vunpack.c.0.s8 %v1250
    %v1252 = vlaneseq
    %v1253 = vshrl.u32 %v1252, 7
    %v1254 = vsub.s32 %v1251, %v1253
    %v1255 = vrot.slane %v1241, %v1254
    %1258 = vst.msk [vmem:[#allocation5 + $0x6] sm:$0x1] %vm891, %v1248
    %1259 = vst.msk [vmem:[#allocation5 + $0xe] sm:$0x1] %vm891, %v1255
    %v1260 = vld [vmem:[%s797] sm:$0x3]
    %v1261 = vsel %vm204, %v1260, 0.0
    %1262 = vadd.xlane.f32.xlu0 %v1261
    %v1263 = vpop.xlane.xlu0 %1262
    %v1264 = vmul.f32 %v1263, %v813
    %v1265 = vsub.f32 %v1260, %v1264
    %v1266 = vmul.f32 %v1265, %v1265
    %v1267 = vsel %vm204, %v1266, 0.0
    %1268 = vadd.xlane.f32.xlu0 %v1267
    %v1269 = vpop.xlane.xlu0 %1268
    %v1270 = vmul.f32 %v1269, %v813
    %v1271 = vadd.f32 %v1270, 1e-05
    %v1272 = vrsqrt.pop %v1271
    %v1273 = vmul.f32 %v1265, %v1272
    %v1274 = vmul.f32 %v1273, %v828
    %v1275 = vadd.f32 %v1274, %v835
    %v1276 = vrot.slane %v39, 6
    %v1278 = vadd.f32 %v1275, %v1276
    %v1279 = vsel %vm204, %v1278, 0.0
    %1280 = vadd.xlane.f32.xlu0 %v1279
    %v1281 = vpop.xlane.xlu0 %1280
    %v1282 = vmul.f32 %v1281, %v813
    %v1283 = vsub.f32 %v1278, %v1282
    %v1284 = vmul.f32 %v1283, %v1283
    %v1285 = vsel %vm204, %v1284, 0.0
    %1286 = vadd.xlane.f32.xlu0 %v1285
    %v1287 = vpop.xlane.xlu0 %1286
    %v1288 = vmul.f32 %v1287, %v813
    %v1289 = vadd.f32 %v1288, 1e-05
    %v1290 = vrsqrt.pop %v1289
    %v1291 = vmul.f32 %v1283, %v1290
    %v1292 = vmul.f32 %v1291, %v856
    %v1293 = vadd.f32 %v1292, %v863
    %v1296 = vunpack.c.l.s4 1966171168
    %v1297 = vunpack.c.0.s8 %v1296
    %v1298 = vlaneseq
    %v1299 = vshrl.u32 %v1298, 7
    %v1300 = vsub.s32 %v1297, %v1299
    %v1301 = vrot.slane %v1293, %v1300
    %v1302 = vcombine.high %v1301, %v1301
    %v1304 = vunpack.c.l.s4 1966171168
    %v1305 = vunpack.c.0.s8 %v1304
    %v1306 = vlaneseq
    %v1307 = vshrl.u32 %v1306, 7
    %v1308 = vsub.s32 %v1305, %v1307
    %v1309 = vrot.slane %v1301, %v1308
    %v1311 = vunpack.c.l.s4 1966171168
    %v1312 = vunpack.c.0.s8 %v1311
    %v1313 = vlaneseq
    %v1314 = vshrl.u32 %v1313, 7
    %v1315 = vsub.s32 %v1312, %v1314
    %v1316 = vrot.slane %v1302, %v1315
    %1319 = vst.msk [vmem:[#allocation5 + $0x7] sm:$0x1] %vm891, %v1309
    %1320 = vst.msk [vmem:[#allocation5 + $0xf] sm:$0x1] %vm891, %v1316
    // Predicated region
    $region38: #{lstm_block_forward.3} parent=1 // pred_check
      _
    $region39: #{lstm_block_forward.3} parent=1 // pred_check_branch
      %1322 = sbr.rel (0) target = $region41
    $region40: #{lstm_block_forward.3} parent=1 // pred_region
      %s1324 = ssub.s32 256, 256
      %1325 = vsyncadd [#allocation6], %s1324
      %s1326 = sshll.u32 [#allocation5], 4
      %s1327 = int_to_ptr.vmem [resolvable:$true] %s1326
      %1332 = dma.vmem_to_hbm [thread:$0]  %s1327, 256, %s8, [#allocation6], 128, 128, 8
    $region41: #{lstm_block_forward.3} parent=1 // pred_fallthru
      _
    // Predicated region
    $region42: #{lstm_block_forward.3} parent=1 // pred_check
      _
    $region43: #{lstm_block_forward.3} parent=1 // pred_check_branch
      %1334 = sbr.rel (0) target = $region45
    $region44: #{lstm_block_forward.3} parent=1 // pred_region
      %1335 = dma.done [#allocation6], 256
    $region45: #{lstm_block_forward.3} parent=1 // pred_fallthru
      _
    %1336 = vsyncpa [#allocation6], 1

</llo_original>
